<compile_context>
chip_gen: v5e
topology: v5e:2x2
jax: 0.10.0
libtpu: 0.0.40
codegen_flags: <defaults>
</compile_context>

<pallas_src>
import jax
import jax.numpy as jnp
from jax import lax
from jax.experimental import pallas as pl
from jax.experimental.pallas import tpu as pltpu


def _round_up(x, m):
    return ((x + m - 1) // m) * m


def lstm_kernel(x_ref, wih_ref, whh_ref, b_ref, wout_ref, bout_ref,
                out_ref, gx_ref):
    """Full LSTM recurrence + relu + final linear, entirely in VMEM.

    x_ref   : (T*Bp, D)    time-major input, batch padded to Bp sublanes
    wih_ref : (D, 4*Hp)    input->gate weights, each gate block lane-aligned
    whh_ref : (Hp, 4*Hp)   hidden->gate weights (rows H..Hp-1 zero)
    b_ref   : (1, 4*Hp)    combined bias b_ih + b_hh (padded lanes zero)
    wout_ref: (Hp, Cp)     classifier weights (padded rows/cols zero)
    bout_ref: (1, Cp)      classifier bias
    out_ref : (Bp, Cp)     logits (padding sliced off by the wrapper)
    gx_ref  : (T*Bp, 4*Hp) scratch: precomputed input projection + bias
    """
    Bp = out_ref.shape[0]
    Hp = whh_ref.shape[0]
    T = x_ref.shape[0] // Bp

    # (1) Hoisted input projection: one big MXU matmul, bias folded in once.
    gx_ref[...] = (
        jnp.dot(x_ref[...], wih_ref[...], preferred_element_type=jnp.float32)
        + b_ref[...]
    )

    # (2) Loop-invariant hidden->gate weights loaded once.
    whh = whh_ref[...]

    # (3) Recurrence: h / c carried as values (one vreg each at these shapes);
    #     loop fully unrolled (T static & small) for scheduler visibility.
    h = jnp.zeros((Bp, Hp), jnp.float32)
    c = jnp.zeros((Bp, Hp), jnp.float32)
    for t in range(T):
        gates = gx_ref[t * Bp:(t + 1) * Bp, :] + jnp.dot(
            h, whh, preferred_element_type=jnp.float32)       # (Bp, 4*Hp)
        i = jax.nn.sigmoid(gates[:, 0 * Hp:1 * Hp])            # lane-aligned
        f = jax.nn.sigmoid(gates[:, 1 * Hp:2 * Hp])            # slices
        g = jnp.tanh(gates[:, 2 * Hp:3 * Hp])
        o = jax.nn.sigmoid(gates[:, 3 * Hp:4 * Hp])
        c = f * c + i * g
        h = o * jnp.tanh(c)

    # (4) relu + classifier; (Bp, Cp) is a full lane-dense tile -> unmasked store.
    out_ref[...] = (
        jnp.dot(jnp.maximum(h, 0.0), wout_ref[...],
                preferred_element_type=jnp.float32)
        + bout_ref[...]
    )


def lstm_model_forward(x_btd, params):
    """x_btd: (B, T, D) float32 (PyTorch batch_first layout)."""
    B, T, D = x_btd.shape
    H = params["whh"].shape[0]
    C = params["wout"].shape[1]

    Bp = _round_up(B, 8)        # pad batch to a full sublane tile
    Hp = _round_up(H, 128)      # pad hidden so gate slices are lane-aligned
    Cp = _round_up(C, 128)      # lane-dense classifier output

    f32 = jnp.float32

    def pad_gate_cols(w):
        # (rows, 4H) -> (rows, 4Hp): gate k placed at columns [k*Hp, k*Hp+H)
        out = jnp.zeros((w.shape[0], 4 * Hp), f32)
        for k in range(4):
            out = out.at[:, k * Hp:k * Hp + H].set(w[:, k * H:(k + 1) * H])
        return out

    wih_p = pad_gate_cols(params["wih"])                                # (D, 4Hp)
    whh_p = pad_gate_cols(
        jnp.zeros((Hp, 4 * H), f32).at[:H, :].set(params["whh"]))       # (Hp, 4Hp)
    bias_p = pad_gate_cols(
        (params["b_ih"] + params["b_hh"]).reshape(1, 4 * H))            # (1, 4Hp)
    wout_p = jnp.zeros((Hp, Cp), f32).at[:H, :C].set(params["wout"])    # (Hp, Cp)
    bout_p = jnp.zeros((1, Cp), f32).at[0, :C].set(params["b_out"])     # (1, Cp)

    # Time-major, batch padded to Bp sublanes, flattened so the kernel can do
    # a single (T*Bp, D) x (D, 4Hp) matmul and take tile-aligned per-step
    # slices.  At these shapes x is a few KiB, so the relayout is negligible.
    # TODO(synk): for non-toy T, stream x through a grid over T chunks
    # (BlockSpec on x, "arbitrary" axis, persistent h/c scratch) instead of
    # keeping the whole sequence VMEM-resident.
    x_tbd = jnp.transpose(x_btd, (1, 0, 2))                             # (T, B, D)
    x_pad = jnp.zeros((T, Bp, D), f32).at[:, :B, :].set(x_tbd)
    x_flat = x_pad.reshape(T * Bp, D)

    vmem = pl.BlockSpec(memory_space=pltpu.MemorySpace.VMEM)
    out_p = pl.pallas_call(
        lstm_kernel,
        out_shape=jax.ShapeDtypeStruct((Bp, Cp), f32),
        in_specs=[vmem] * 6,
        out_specs=vmem,
        scratch_shapes=[pltpu.VMEM((T * Bp, 4 * Hp), f32)],
        compiler_params=pltpu.CompilerParams(
            vmem_limit_bytes=32 * 1024 * 1024),
    )(x_flat, wih_p, whh_p, bias_p, wout_p, bout_p)
    return out_p[:B, :C]


def init_params(key, input_size, hidden_size, num_classes):
    """Deterministic init matching PyTorch parameter shapes.

    nn.LSTM: weight_ih_l0 (4H, D), weight_hh_l0 (4H, H), bias_ih/bias_hh (4H,)
    nn.Linear: weight (C, H), bias (C,)
    (stored pre-transposed for row-major (B, D) @ (D, 4H) kernel matmuls)
    """
    ks = jax.random.split(key, 6)
    bound = 1.0 / jnp.sqrt(hidden_size)
    u = lambda k, shape, b: jax.random.uniform(k, shape, jnp.float32, -b, b)
    return {
        "wih": u(ks[0], (input_size, 4 * hidden_size), bound),
        "whh": u(ks[1], (hidden_size, 4 * hidden_size), bound),
        "b_ih": u(ks[2], (4 * hidden_size,), bound),
        "b_hh": u(ks[3], (4 * hidden_size,), bound),
        "wout": u(ks[4], (hidden_size, num_classes), bound),
        "b_out": u(ks[5], (num_classes,), bound),
    }


def lstm_model_reference(x_btd, params):
    """Pure-JAX reference of the PyTorch forward, for correctness check."""
    B, T, D = x_btd.shape
    H = params["whh"].shape[0]
    bias = params["b_ih"] + params["b_hh"]
    h = jnp.zeros((B, H), jnp.float32)
    c = jnp.zeros((B, H), jnp.float32)

    def step(carry, x_t):
        h, c = carry
        gates = x_t @ params["wih"] + h @ params["whh"] + bias
        i = jax.nn.sigmoid(gates[:, 0:H])
        f = jax.nn.sigmoid(gates[:, H:2 * H])
        g = jnp.tanh(gates[:, 2 * H:3 * H])
        o = jax.nn.sigmoid(gates[:, 3 * H:4 * H])
        c = f * c + i * g
        h = o * jnp.tanh(c)
        return (h, c), None

    (h, c), _ = lax.scan(step, (h, c), jnp.transpose(x_btd, (1, 0, 2)))
    return jnp.maximum(h, 0.0) @ params["wout"] + params["b_out"]


if __name__ == "__main__":
    B, T, D, H, C = 2, 8, 16, 32, 10   # batch, seq, input_size, hidden, classes

    key = jax.random.PRNGKey(0)
    k_x, k_p = jax.random.split(key)
    x = jax.random.normal(k_x, (B, T, D), jnp.float32)
    params = init_params(k_p, D, H, C)

    out = jax.block_until_ready(lstm_model_forward(x, params))
    ref = jax.block_until_ready(lstm_model_reference(x, params))

    assert out.shape == (B, C)
    assert jnp.allclose(out, ref, atol=1e-5, rtol=1e-5), (out, ref)
    print("KERNEL_OK")
</pallas_src>

<mosaic_0001>
module attributes {stable_mosaic.version = 11 : i64} {
  func.func @lstm_kernel(%arg0: memref<64x16xf32, #tpu.memory_space<vmem>>, %arg1: memref<16x512xf32, #tpu.memory_space<vmem>>, %arg2: memref<128x512xf32, #tpu.memory_space<vmem>>, %arg3: memref<1x512xf32, #tpu.memory_space<vmem>>, %arg4: memref<128x128xf32, #tpu.memory_space<vmem>>, %arg5: memref<1x128xf32, #tpu.memory_space<vmem>>, %arg6: memref<8x128xf32, #tpu.memory_space<vmem>>, %arg7: memref<64x512xf32, #tpu.memory_space<vmem>>) attributes {dimension_semantics = [], scalar_prefetch = 0 : i64, scratch_operands = 1 : i64, tpu.core_type = #tpu.core_type<tc>} {
    %c0 = arith.constant 0 : index
    %c0_0 = arith.constant 0 : index
    %0 = vector.load %arg0[%c0, %c0_0] : memref<64x16xf32, #tpu.memory_space<vmem>>, vector<64x16xf32>
    %c0_1 = arith.constant 0 : index
    %c0_2 = arith.constant 0 : index
    %1 = vector.load %arg1[%c0_1, %c0_2] : memref<16x512xf32, #tpu.memory_space<vmem>>, vector<16x512xf32>
    %cst = arith.constant dense<0.000000e+00> : vector<64x512xf32>
    %2 = tpu.matmul %0, %1, %cst {dimension_numbers = #tpu.dot_dimension_numbers<[1], [0], [0], [1], [0, 0, 1, 1], [], []>} : vector<64x16xf32>, vector<16x512xf32>, vector<64x512xf32> -> vector<64x512xf32>
    %c0_3 = arith.constant 0 : index
    %c0_4 = arith.constant 0 : index
    %3 = vector.load %arg3[%c0_3, %c0_4] : memref<1x512xf32, #tpu.memory_space<vmem>>, vector<1x512xf32>
    %4 = vector.broadcast %3 : vector<1x512xf32> to vector<64x512xf32>
    %5 = arith.addf %2, %4 : vector<64x512xf32>
    %c0_5 = arith.constant 0 : index
    %c0_6 = arith.constant 0 : index
    %6 = vector.load %arg7[%c0_5, %c0_6] : memref<64x512xf32, #tpu.memory_space<vmem>>, vector<64x512xf32>
    tpu.vector_store %arg7[%c0_5, %c0_6], %5 {strides = array<i32>} : memref<64x512xf32, #tpu.memory_space<vmem>>, vector<64x512xf32>,
    %c0_7 = arith.constant 0 : index
    %c0_8 = arith.constant 0 : index
    %7 = vector.load %arg2[%c0_7, %c0_8] : memref<128x512xf32, #tpu.memory_space<vmem>>, vector<128x512xf32>
    %cst_9 = arith.constant 0.000000e+00 : f32
    %8 = vector.broadcast %cst_9 : f32 to vector<8x128xf32>
    %cst_10 = arith.constant 0.000000e+00 : f32
    %9 = vector.broadcast %cst_10 : f32 to vector<8x128xf32>
    %c0_11 = arith.constant 0 : index
    %c0_12 = arith.constant 0 : index
    %10 = vector.load %arg7[%c0_11, %c0_12] : memref<64x512xf32, #tpu.memory_space<vmem>>, vector<8x512xf32>
    %cst_13 = arith.constant dense<0.000000e+00> : vector<8x512xf32>
    %11 = tpu.matmul %8, %7, %cst_13 {dimension_numbers = #tpu.dot_dimension_numbers<[1], [0], [0], [1], [0, 0, 1, 1], [], []>} : vector<8x128xf32>, vector<128x512xf32>, vector<8x512xf32> -> vector<8x512xf32>
    %12 = arith.addf %10, %11 : vector<8x512xf32>
    %13 = vector.extract_strided_slice %12 {offsets = [0, 0], sizes = [8, 128], strides = [1, 1]} : vector<8x512xf32> to vector<8x128xf32>
    %14 = arith.negf %13 : vector<8x128xf32>
    %15 = math.exp %14 : vector<8x128xf32>
    %cst_14 = arith.constant 1.000000e+00 : f32
    %16 = vector.broadcast %cst_14 : f32 to vector<8x128xf32>
    %17 = arith.addf %16, %15 : vector<8x128xf32>
    %18 = arith.divf %16, %17 : vector<8x128xf32>
    %19 = vector.extract_strided_slice %12 {offsets = [0, 128], sizes = [8, 128], strides = [1, 1]} : vector<8x512xf32> to vector<8x128xf32>
    %20 = arith.negf %19 : vector<8x128xf32>
    %21 = math.exp %20 : vector<8x128xf32>
    %cst_15 = arith.constant 1.000000e+00 : f32
    %22 = vector.broadcast %cst_15 : f32 to vector<8x128xf32>
    %23 = arith.addf %22, %21 : vector<8x128xf32>
    %24 = arith.divf %22, %23 : vector<8x128xf32>
    %25 = vector.extract_strided_slice %12 {offsets = [0, 256], sizes = [8, 128], strides = [1, 1]} : vector<8x512xf32> to vector<8x128xf32>
    %26 = math.tanh %25 : vector<8x128xf32>
    %27 = vector.extract_strided_slice %12 {offsets = [0, 384], sizes = [8, 128], strides = [1, 1]} : vector<8x512xf32> to vector<8x128xf32>
    %28 = arith.negf %27 : vector<8x128xf32>
    %29 = math.exp %28 : vector<8x128xf32>
    %cst_16 = arith.constant 1.000000e+00 : f32
    %30 = vector.broadcast %cst_16 : f32 to vector<8x128xf32>
    %31 = arith.addf %30, %29 : vector<8x128xf32>
    %32 = arith.divf %30, %31 : vector<8x128xf32>
    %33 = arith.mulf %24, %9 : vector<8x128xf32>
    %34 = arith.mulf %18, %26 : vector<8x128xf32>
    %35 = arith.addf %33, %34 : vector<8x128xf32>
    %36 = math.tanh %35 : vector<8x128xf32>
    %37 = arith.mulf %32, %36 : vector<8x128xf32>
    %c8 = arith.constant 8 : index
    %c0_17 = arith.constant 0 : index
    %38 = vector.load %arg7[%c8, %c0_17] : memref<64x512xf32, #tpu.memory_space<vmem>>, vector<8x512xf32>
    %cst_18 = arith.constant dense<0.000000e+00> : vector<8x512xf32>
    %39 = tpu.matmul %37, %7, %cst_18 {dimension_numbers = #tpu.dot_dimension_numbers<[1], [0], [0], [1], [0, 0, 1, 1], [], []>} : vector<8x128xf32>, vector<128x512xf32>, vector<8x512xf32> -> vector<8x512xf32>
    %40 = arith.addf %38, %39 : vector<8x512xf32>
    %41 = vector.extract_strided_slice %40 {offsets = [0, 0], sizes = [8, 128], strides = [1, 1]} : vector<8x512xf32> to vector<8x128xf32>
    %42 = arith.negf %41 : vector<8x128xf32>
    %43 = math.exp %42 : vector<8x128xf32>
    %cst_19 = arith.constant 1.000000e+00 : f32
    %44 = vector.broadcast %cst_19 : f32 to vector<8x128xf32>
    %45 = arith.addf %44, %43 : vector<8x128xf32>
    %46 = arith.divf %44, %45 : vector<8x128xf32>
    %47 = vector.extract_strided_slice %40 {offsets = [0, 128], sizes = [8, 128], strides = [1, 1]} : vector<8x512xf32> to vector<8x128xf32>
    %48 = arith.negf %47 : vector<8x128xf32>
    %49 = math.exp %48 : vector<8x128xf32>
    %cst_20 = arith.constant 1.000000e+00 : f32
    %50 = vector.broadcast %cst_20 : f32 to vector<8x128xf32>
    %51 = arith.addf %50, %49 : vector<8x128xf32>
    %52 = arith.divf %50, %51 : vector<8x128xf32>
    %53 = vector.extract_strided_slice %40 {offsets = [0, 256], sizes = [8, 128], strides = [1, 1]} : vector<8x512xf32> to vector<8x128xf32>
    %54 = math.tanh %53 : vector<8x128xf32>
    %55 = vector.extract_strided_slice %40 {offsets = [0, 384], sizes = [8, 128], strides = [1, 1]} : vector<8x512xf32> to vector<8x128xf32>
    %56 = arith.negf %55 : vector<8x128xf32>
    %57 = math.exp %56 : vector<8x128xf32>
    %cst_21 = arith.constant 1.000000e+00 : f32
    %58 = vector.broadcast %cst_21 : f32 to vector<8x128xf32>
    %59 = arith.addf %58, %57 : vector<8x128xf32>
    %60 = arith.divf %58, %59 : vector<8x128xf32>
    %61 = arith.mulf %52, %35 : vector<8x128xf32>
    %62 = arith.mulf %46, %54 : vector<8x128xf32>
    %63 = arith.addf %61, %62 : vector<8x128xf32>
    %64 = math.tanh %63 : vector<8x128xf32>
    %65 = arith.mulf %60, %64 : vector<8x128xf32>
    %c16 = arith.constant 16 : index
    %c0_22 = arith.constant 0 : index
    %66 = vector.load %arg7[%c16, %c0_22] : memref<64x512xf32, #tpu.memory_space<vmem>>, vector<8x512xf32>
    %cst_23 = arith.constant dense<0.000000e+00> : vector<8x512xf32>
    %67 = tpu.matmul %65, %7, %cst_23 {dimension_numbers = #tpu.dot_dimension_numbers<[1], [0], [0], [1], [0, 0, 1, 1], [], []>} : vector<8x128xf32>, vector<128x512xf32>, vector<8x512xf32> -> vector<8x512xf32>
    %68 = arith.addf %66, %67 : vector<8x512xf32>
    %69 = vector.extract_strided_slice %68 {offsets = [0, 0], sizes = [8, 128], strides = [1, 1]} : vector<8x512xf32> to vector<8x128xf32>
    %70 = arith.negf %69 : vector<8x128xf32>
    %71 = math.exp %70 : vector<8x128xf32>
    %cst_24 = arith.constant 1.000000e+00 : f32
    %72 = vector.broadcast %cst_24 : f32 to vector<8x128xf32>
    %73 = arith.addf %72, %71 : vector<8x128xf32>
    %74 = arith.divf %72, %73 : vector<8x128xf32>
    %75 = vector.extract_strided_slice %68 {offsets = [0, 128], sizes = [8, 128], strides = [1, 1]} : vector<8x512xf32> to vector<8x128xf32>
    %76 = arith.negf %75 : vector<8x128xf32>
    %77 = math.exp %76 : vector<8x128xf32>
    %cst_25 = arith.constant 1.000000e+00 : f32
    %78 = vector.broadcast %cst_25 : f32 to vector<8x128xf32>
    %79 = arith.addf %78, %77 : vector<8x128xf32>
    %80 = arith.divf %78, %79 : vector<8x128xf32>
    %81 = vector.extract_strided_slice %68 {offsets = [0, 256], sizes = [8, 128], strides = [1, 1]} : vector<8x512xf32> to vector<8x128xf32>
    %82 = math.tanh %81 : vector<8x128xf32>
    %83 = vector.extract_strided_slice %68 {offsets = [0, 384], sizes = [8, 128], strides = [1, 1]} : vector<8x512xf32> to vector<8x128xf32>
    %84 = arith.negf %83 : vector<8x128xf32>
    %85 = math.exp %84 : vector<8x128xf32>
    %cst_26 = arith.constant 1.000000e+00 : f32
    %86 = vector.broadcast %cst_26 : f32 to vector<8x128xf32>
    %87 = arith.addf %86, %85 : vector<8x128xf32>
    %88 = arith.divf %86, %87 : vector<8x128xf32>
    %89 = arith.mulf %80, %63 : vector<8x128xf32>
    %90 = arith.mulf %74, %82 : vector<8x128xf32>
    %91 = arith.addf %89, %90 : vector<8x128xf32>
    %92 = math.tanh %91 : vector<8x128xf32>
    %93 = arith.mulf %88, %92 : vector<8x128xf32>
    %c24 = arith.constant 24 : index
    %c0_27 = arith.constant 0 : index
    %94 = vector.load %arg7[%c24, %c0_27] : memref<64x512xf32, #tpu.memory_space<vmem>>, vector<8x512xf32>
    %cst_28 = arith.constant dense<0.000000e+00> : vector<8x512xf32>
    %95 = tpu.matmul %93, %7, %cst_28 {dimension_numbers = #tpu.dot_dimension_numbers<[1], [0], [0], [1], [0, 0, 1, 1], [], []>} : vector<8x128xf32>, vector<128x512xf32>, vector<8x512xf32> -> vector<8x512xf32>
    %96 = arith.addf %94, %95 : vector<8x512xf32>
    %97 = vector.extract_strided_slice %96 {offsets = [0, 0], sizes = [8, 128], strides = [1, 1]} : vector<8x512xf32> to vector<8x128xf32>
    %98 = arith.negf %97 : vector<8x128xf32>
    %99 = math.exp %98 : vector<8x128xf32>
    %cst_29 = arith.constant 1.000000e+00 : f32
    %100 = vector.broadcast %cst_29 : f32 to vector<8x128xf32>
    %101 = arith.addf %100, %99 : vector<8x128xf32>
    %102 = arith.divf %100, %101 : vector<8x128xf32>
    %103 = vector.extract_strided_slice %96 {offsets = [0, 128], sizes = [8, 128], strides = [1, 1]} : vector<8x512xf32> to vector<8x128xf32>
    %104 = arith.negf %103 : vector<8x128xf32>
    %105 = math.exp %104 : vector<8x128xf32>
    %cst_30 = arith.constant 1.000000e+00 : f32
    %106 = vector.broadcast %cst_30 : f32 to vector<8x128xf32>
    %107 = arith.addf %106, %105 : vector<8x128xf32>
    %108 = arith.divf %106, %107 : vector<8x128xf32>
    %109 = vector.extract_strided_slice %96 {offsets = [0, 256], sizes = [8, 128], strides = [1, 1]} : vector<8x512xf32> to vector<8x128xf32>
    %110 = math.tanh %109 : vector<8x128xf32>
    %111 = vector.extract_strided_slice %96 {offsets = [0, 384], sizes = [8, 128], strides = [1, 1]} : vector<8x512xf32> to vector<8x128xf32>
    %112 = arith.negf %111 : vector<8x128xf32>
    %113 = math.exp %112 : vector<8x128xf32>
    %cst_31 = arith.constant 1.000000e+00 : f32
    %114 = vector.broadcast %cst_31 : f32 to vector<8x128xf32>
    %115 = arith.addf %114, %113 : vector<8x128xf32>
    %116 = arith.divf %114, %115 : vector<8x128xf32>
    %117 = arith.mulf %108, %91 : vector<8x128xf32>
    %118 = arith.mulf %102, %110 : vector<8x128xf32>
    %119 = arith.addf %117, %118 : vector<8x128xf32>
    %120 = math.tanh %119 : vector<8x128xf32>
    %121 = arith.mulf %116, %120 : vector<8x128xf32>
    %c32 = arith.constant 32 : index
    %c0_32 = arith.constant 0 : index
    %122 = vector.load %arg7[%c32, %c0_32] : memref<64x512xf32, #tpu.memory_space<vmem>>, vector<8x512xf32>
    %cst_33 = arith.constant dense<0.000000e+00> : vector<8x512xf32>
    %123 = tpu.matmul %121, %7, %cst_33 {dimension_numbers = #tpu.dot_dimension_numbers<[1], [0], [0], [1], [0, 0, 1, 1], [], []>} : vector<8x128xf32>, vector<128x512xf32>, vector<8x512xf32> -> vector<8x512xf32>
    %124 = arith.addf %122, %123 : vector<8x512xf32>
    %125 = vector.extract_strided_slice %124 {offsets = [0, 0], sizes = [8, 128], strides = [1, 1]} : vector<8x512xf32> to vector<8x128xf32>
    %126 = arith.negf %125 : vector<8x128xf32>
    %127 = math.exp %126 : vector<8x128xf32>
    %cst_34 = arith.constant 1.000000e+00 : f32
    %128 = vector.broadcast %cst_34 : f32 to vector<8x128xf32>
    %129 = arith.addf %128, %127 : vector<8x128xf32>
    %130 = arith.divf %128, %129 : vector<8x128xf32>
    %131 = vector.extract_strided_slice %124 {offsets = [0, 128], sizes = [8, 128], strides = [1, 1]} : vector<8x512xf32> to vector<8x128xf32>
    %132 = arith.negf %131 : vector<8x128xf32>
    %133 = math.exp %132 : vector<8x128xf32>
    %cst_35 = arith.constant 1.000000e+00 : f32
    %134 = vector.broadcast %cst_35 : f32 to vector<8x128xf32>
    %135 = arith.addf %134, %133 : vector<8x128xf32>
    %136 = arith.divf %134, %135 : vector<8x128xf32>
    %137 = vector.extract_strided_slice %124 {offsets = [0, 256], sizes = [8, 128], strides = [1, 1]} : vector<8x512xf32> to vector<8x128xf32>
    %138 = math.tanh %137 : vector<8x128xf32>
    %139 = vector.extract_strided_slice %124 {offsets = [0, 384], sizes = [8, 128], strides = [1, 1]} : vector<8x512xf32> to vector<8x128xf32>
    %140 = arith.negf %139 : vector<8x128xf32>
    %141 = math.exp %140 : vector<8x128xf32>
    %cst_36 = arith.constant 1.000000e+00 : f32
    %142 = vector.broadcast %cst_36 : f32 to vector<8x128xf32>
    %143 = arith.addf %142, %141 : vector<8x128xf32>
    %144 = arith.divf %142, %143 : vector<8x128xf32>
    %145 = arith.mulf %136, %119 : vector<8x128xf32>
    %146 = arith.mulf %130, %138 : vector<8x128xf32>
    %147 = arith.addf %145, %146 : vector<8x128xf32>
    %148 = math.tanh %147 : vector<8x128xf32>
    %149 = arith.mulf %144, %148 : vector<8x128xf32>
    %c40 = arith.constant 40 : index
    %c0_37 = arith.constant 0 : index
    %150 = vector.load %arg7[%c40, %c0_37] : memref<64x512xf32, #tpu.memory_space<vmem>>, vector<8x512xf32>
    %cst_38 = arith.constant dense<0.000000e+00> : vector<8x512xf32>
    %151 = tpu.matmul %149, %7, %cst_38 {dimension_numbers = #tpu.dot_dimension_numbers<[1], [0], [0], [1], [0, 0, 1, 1], [], []>} : vector<8x128xf32>, vector<128x512xf32>, vector<8x512xf32> -> vector<8x512xf32>
    %152 = arith.addf %150, %151 : vector<8x512xf32>
    %153 = vector.extract_strided_slice %152 {offsets = [0, 0], sizes = [8, 128], strides = [1, 1]} : vector<8x512xf32> to vector<8x128xf32>
    %154 = arith.negf %153 : vector<8x128xf32>
    %155 = math.exp %154 : vector<8x128xf32>
    %cst_39 = arith.constant 1.000000e+00 : f32
    %156 = vector.broadcast %cst_39 : f32 to vector<8x128xf32>
    %157 = arith.addf %156, %155 : vector<8x128xf32>
    %158 = arith.divf %156, %157 : vector<8x128xf32>
    %159 = vector.extract_strided_slice %152 {offsets = [0, 128], sizes = [8, 128], strides = [1, 1]} : vector<8x512xf32> to vector<8x128xf32>
    %160 = arith.negf %159 : vector<8x128xf32>
    %161 = math.exp %160 : vector<8x128xf32>
    %cst_40 = arith.constant 1.000000e+00 : f32
    %162 = vector.broadcast %cst_40 : f32 to vector<8x128xf32>
    %163 = arith.addf %162, %161 : vector<8x128xf32>
    %164 = arith.divf %162, %163 : vector<8x128xf32>
    %165 = vector.extract_strided_slice %152 {offsets = [0, 256], sizes = [8, 128], strides = [1, 1]} : vector<8x512xf32> to vector<8x128xf32>
    %166 = math.tanh %165 : vector<8x128xf32>
    %167 = vector.extract_strided_slice %152 {offsets = [0, 384], sizes = [8, 128], strides = [1, 1]} : vector<8x512xf32> to vector<8x128xf32>
    %168 = arith.negf %167 : vector<8x128xf32>
    %169 = math.exp %168 : vector<8x128xf32>
    %cst_41 = arith.constant 1.000000e+00 : f32
    %170 = vector.broadcast %cst_41 : f32 to vector<8x128xf32>
    %171 = arith.addf %170, %169 : vector<8x128xf32>
    %172 = arith.divf %170, %171 : vector<8x128xf32>
    %173 = arith.mulf %164, %147 : vector<8x128xf32>
    %174 = arith.mulf %158, %166 : vector<8x128xf32>
    %175 = arith.addf %173, %174 : vector<8x128xf32>
    %176 = math.tanh %175 : vector<8x128xf32>
    %177 = arith.mulf %172, %176 : vector<8x128xf32>
    %c48 = arith.constant 48 : index
    %c0_42 = arith.constant 0 : index
    %178 = vector.load %arg7[%c48, %c0_42] : memref<64x512xf32, #tpu.memory_space<vmem>>, vector<8x512xf32>
    %cst_43 = arith.constant dense<0.000000e+00> : vector<8x512xf32>
    %179 = tpu.matmul %177, %7, %cst_43 {dimension_numbers = #tpu.dot_dimension_numbers<[1], [0], [0], [1], [0, 0, 1, 1], [], []>} : vector<8x128xf32>, vector<128x512xf32>, vector<8x512xf32> -> vector<8x512xf32>
    %180 = arith.addf %178, %179 : vector<8x512xf32>
    %181 = vector.extract_strided_slice %180 {offsets = [0, 0], sizes = [8, 128], strides = [1, 1]} : vector<8x512xf32> to vector<8x128xf32>
    %182 = arith.negf %181 : vector<8x128xf32>
    %183 = math.exp %182 : vector<8x128xf32>
    %cst_44 = arith.constant 1.000000e+00 : f32
    %184 = vector.broadcast %cst_44 : f32 to vector<8x128xf32>
    %185 = arith.addf %184, %183 : vector<8x128xf32>
    %186 = arith.divf %184, %185 : vector<8x128xf32>
    %187 = vector.extract_strided_slice %180 {offsets = [0, 128], sizes = [8, 128], strides = [1, 1]} : vector<8x512xf32> to vector<8x128xf32>
    %188 = arith.negf %187 : vector<8x128xf32>
    %189 = math.exp %188 : vector<8x128xf32>
    %cst_45 = arith.constant 1.000000e+00 : f32
    %190 = vector.broadcast %cst_45 : f32 to vector<8x128xf32>
    %191 = arith.addf %190, %189 : vector<8x128xf32>
    %192 = arith.divf %190, %191 : vector<8x128xf32>
    %193 = vector.extract_strided_slice %180 {offsets = [0, 256], sizes = [8, 128], strides = [1, 1]} : vector<8x512xf32> to vector<8x128xf32>
    %194 = math.tanh %193 : vector<8x128xf32>
    %195 = vector.extract_strided_slice %180 {offsets = [0, 384], sizes = [8, 128], strides = [1, 1]} : vector<8x512xf32> to vector<8x128xf32>
    %196 = arith.negf %195 : vector<8x128xf32>
    %197 = math.exp %196 : vector<8x128xf32>
    %cst_46 = arith.constant 1.000000e+00 : f32
    %198 = vector.broadcast %cst_46 : f32 to vector<8x128xf32>
    %199 = arith.addf %198, %197 : vector<8x128xf32>
    %200 = arith.divf %198, %199 : vector<8x128xf32>
    %201 = arith.mulf %192, %175 : vector<8x128xf32>
    %202 = arith.mulf %186, %194 : vector<8x128xf32>
    %203 = arith.addf %201, %202 : vector<8x128xf32>
    %204 = math.tanh %203 : vector<8x128xf32>
    %205 = arith.mulf %200, %204 : vector<8x128xf32>
    %c56 = arith.constant 56 : index
    %c0_47 = arith.constant 0 : index
    %206 = vector.load %arg7[%c56, %c0_47] : memref<64x512xf32, #tpu.memory_space<vmem>>, vector<8x512xf32>
    %cst_48 = arith.constant dense<0.000000e+00> : vector<8x512xf32>
    %207 = tpu.matmul %205, %7, %cst_48 {dimension_numbers = #tpu.dot_dimension_numbers<[1], [0], [0], [1], [0, 0, 1, 1], [], []>} : vector<8x128xf32>, vector<128x512xf32>, vector<8x512xf32> -> vector<8x512xf32>
    %208 = arith.addf %206, %207 : vector<8x512xf32>
    %209 = vector.extract_strided_slice %208 {offsets = [0, 0], sizes = [8, 128], strides = [1, 1]} : vector<8x512xf32> to vector<8x128xf32>
    %210 = arith.negf %209 : vector<8x128xf32>
    %211 = math.exp %210 : vector<8x128xf32>
    %cst_49 = arith.constant 1.000000e+00 : f32
    %212 = vector.broadcast %cst_49 : f32 to vector<8x128xf32>
    %213 = arith.addf %212, %211 : vector<8x128xf32>
    %214 = arith.divf %212, %213 : vector<8x128xf32>
    %215 = vector.extract_strided_slice %208 {offsets = [0, 128], sizes = [8, 128], strides = [1, 1]} : vector<8x512xf32> to vector<8x128xf32>
    %216 = arith.negf %215 : vector<8x128xf32>
    %217 = math.exp %216 : vector<8x128xf32>
    %cst_50 = arith.constant 1.000000e+00 : f32
    %218 = vector.broadcast %cst_50 : f32 to vector<8x128xf32>
    %219 = arith.addf %218, %217 : vector<8x128xf32>
    %220 = arith.divf %218, %219 : vector<8x128xf32>
    %221 = vector.extract_strided_slice %208 {offsets = [0, 256], sizes = [8, 128], strides = [1, 1]} : vector<8x512xf32> to vector<8x128xf32>
    %222 = math.tanh %221 : vector<8x128xf32>
    %223 = vector.extract_strided_slice %208 {offsets = [0, 384], sizes = [8, 128], strides = [1, 1]} : vector<8x512xf32> to vector<8x128xf32>
    %224 = arith.negf %223 : vector<8x128xf32>
    %225 = math.exp %224 : vector<8x128xf32>
    %cst_51 = arith.constant 1.000000e+00 : f32
    %226 = vector.broadcast %cst_51 : f32 to vector<8x128xf32>
    %227 = arith.addf %226, %225 : vector<8x128xf32>
    %228 = arith.divf %226, %227 : vector<8x128xf32>
    %229 = arith.mulf %220, %203 : vector<8x128xf32>
    %230 = arith.mulf %214, %222 : vector<8x128xf32>
    %231 = arith.addf %229, %230 : vector<8x128xf32>
    %232 = math.tanh %231 : vector<8x128xf32>
    %233 = arith.mulf %228, %232 : vector<8x128xf32>
    %cst_52 = arith.constant 0.000000e+00 : f32
    %234 = vector.broadcast %cst_52 : f32 to vector<8x128xf32>
    %235 = arith.maximumf %233, %234 : vector<8x128xf32>
    %c0_53 = arith.constant 0 : index
    %c0_54 = arith.constant 0 : index
    %236 = vector.load %arg4[%c0_53, %c0_54] : memref<128x128xf32, #tpu.memory_space<vmem>>, vector<128x128xf32>
    %cst_55 = arith.constant dense<0.000000e+00> : vector<8x128xf32>
    %237 = tpu.matmul %235, %236, %cst_55 {dimension_numbers = #tpu.dot_dimension_numbers<[1], [0], [0], [1], [0, 0, 1, 1], [], []>} : vector<8x128xf32>, vector<128x128xf32>, vector<8x128xf32> -> vector<8x128xf32>
    %c0_56 = arith.constant 0 : index
    %c0_57 = arith.constant 0 : index
    %238 = vector.load %arg5[%c0_56, %c0_57] : memref<1x128xf32, #tpu.memory_space<vmem>>, vector<1x128xf32>
    %239 = vector.broadcast %238 : vector<1x128xf32> to vector<8x128xf32>
    %240 = arith.addf %237, %239 : vector<8x128xf32>
    %c0_58 = arith.constant 0 : index
    %c0_59 = arith.constant 0 : index
    %241 = vector.load %arg6[%c0_58, %c0_59] : memref<8x128xf32, #tpu.memory_space<vmem>>, vector<8x128xf32>
    tpu.vector_store %arg6[%c0_58, %c0_59], %240 {strides = array<i32>} : memref<8x128xf32, #tpu.memory_space<vmem>>, vector<8x128xf32>,
    return
  }
}

</mosaic_0001>

<llo_original>
// kernel: tpu_custom_call.1
$region0: #{tpu_custom_call.1}
  #allocation0 [shape = 'u32[]', space=smem, size = 0x4, offset = 0x4, fixed_abs, tag = 'smem constant byte address 0x4 - core index']
  #allocation1 [shape = 'u32[72,128]{1,0:T(1,128)}', space=vmem, size = 0x9000, scoped, tag = 'internal scratch']
  #allocation2 [shape = 'f32[64,512]{1,0:T(8,128)}', space=vmem, size = 0x20000, scoped, tag = 'scratch operand']
  %s0 = inlined_call_operand.vmem [shape: f32[64,16], index: 0, kind: input, shape index: {}]
  %s1 = inlined_call_operand.vmem [shape: f32[16,512], index: 1, kind: input, shape index: {}]
  %s2 = inlined_call_operand.hbm [shape: f32[128,512], index: 2, kind: input, shape index: {}]
  %s3 = inlined_call_operand.vmem [shape: f32[1,512], index: 3, kind: input, shape index: {}]
  %s4 = inlined_call_operand.hbm [shape: f32[128,128], index: 4, kind: input, shape index: {}]
  %s5 = inlined_call_operand.vmem [shape: f32[1,128], index: 5, kind: input, shape index: {}]
  %s6 = inlined_call_operand.hbm [shape: f32[8,128], index: 6, kind: output, shape index: {}]
  %s7 = sld [smem:[#allocation0]]
  $region42: #{tpu_custom_call.1} parent=0
    _
  %s9 = ssub.s32 1, %s7
  %s10 = scalar_select 0, %s9, %s7
  $region1: #{tpu_custom_call.1} parent=0
    #allocation3 [shape = 'u8[262144]{0}', space=vmem, size = 0x40000, scoped, tag = 'input window, operand 2, single buffered']
    #allocation4 [shape = 's32[1]{0}', space=sflag, size = 0x4, scoped, tag = 'scoped memory for tpu_custom_call.1']
    #allocation5 [shape = 's32[1]{0}', space=sflag, size = 0x4, scoped, tag = 'scoped memory for tpu_custom_call.1']
    #allocation6 [shape = 'u8[65536]{0}', space=vmem, size = 0x10000, scoped, tag = 'input window, operand 4, single buffered']
    #allocation7 [shape = 's32[1]{0}', space=sflag, size = 0x4, scoped, tag = 'scoped memory for tpu_custom_call.1']
    #allocation8 [shape = 'u8[4096]{0}', space=vmem, size = 0x1000, scoped, tag = 'output window, operand 0, single buffered']
    %11 = vsyncpa [#allocation4], 0
    %12 = vsyncpa [#allocation7], 0
    %13 = vsyncpa [#allocation5], 0
    // Predicated region
    $region2: #{tpu_custom_call.1} parent=1 // pred_check
      _
    $region3: #{tpu_custom_call.1} parent=1 // pred_check_branch
      %15 = sbr.rel (0) target = $region5
    $region4: #{tpu_custom_call.1} parent=1 // pred_region
      _
    $region5: #{tpu_custom_call.1} parent=1 // pred_fallthru
      _
    // Predicated region
    $region6: #{tpu_custom_call.1} parent=1 // pred_check
      _
    $region7: #{tpu_custom_call.1} parent=1 // pred_check_branch
      %17 = sbr.rel (0) target = $region9
    $region8: #{tpu_custom_call.1} parent=1 // pred_region
      _
    $region9: #{tpu_custom_call.1} parent=1 // pred_fallthru
      _
    // Predicated region
    $region10: #{tpu_custom_call.1} parent=1 // pred_check
      _
    $region11: #{tpu_custom_call.1} parent=1 // pred_check_branch
      %19 = sbr.rel (0) target = $region13
    $region12: #{tpu_custom_call.1} parent=1 // pred_region
      %21 = vsyncadd [#allocation4], 0
      %s22 = sshll.u32 %s2, 4
      %s23 = int_to_ptr.hbm [resolvable:$true] %s22
      %s24 = sshll.u32 [#allocation3], 4
      %s25 = int_to_ptr.vmem [resolvable:$true] %s24
      %30 = dma.hbm_to_vmem [thread:$0]  %s23, 8192, %s25, [#allocation4], 512, 512, 32
    $region13: #{tpu_custom_call.1} parent=1 // pred_fallthru
      _
    // Predicated region
    $region14: #{tpu_custom_call.1} parent=1 // pred_check
      _
    $region15: #{tpu_custom_call.1} parent=1 // pred_check_branch
      %32 = sbr.rel (0) target = $region17
    $region16: #{tpu_custom_call.1} parent=1 // pred_region
      _
    $region17: #{tpu_custom_call.1} parent=1 // pred_fallthru
      _
    // Predicated region
    $region18: #{tpu_custom_call.1} parent=1 // pred_check
      _
    $region19: #{tpu_custom_call.1} parent=1 // pred_check_branch
      %34 = sbr.rel (0) target = $region21
    $region20: #{tpu_custom_call.1} parent=1 // pred_region
      %36 = vsyncadd [#allocation7], 0
      %s37 = sshll.u32 %s4, 4
      %s38 = int_to_ptr.hbm [resolvable:$true] %s37
      %s39 = sshll.u32 [#allocation6], 4
      %s40 = int_to_ptr.vmem [resolvable:$true] %s39
      %45 = dma.hbm_to_vmem [thread:$0]  %s38, 2048, %s40, [#allocation7], 128, 128, 8
    $region21: #{tpu_custom_call.1} parent=1 // pred_fallthru
      _
    // Predicated region
    $region22: #{tpu_custom_call.1} parent=1 // pred_check
      _
    $region23: #{tpu_custom_call.1} parent=1 // pred_check_branch
      %47 = sbr.rel (0) target = $region25
    $region24: #{tpu_custom_call.1} parent=1 // pred_region
      _
    $region25: #{tpu_custom_call.1} parent=1 // pred_fallthru
      _
    // Predicated region
    $region26: #{tpu_custom_call.1} parent=1 // pred_check
      _
    $region27: #{tpu_custom_call.1} parent=1 // pred_check_branch
      %49 = sbr.rel (0) target = $region29
    $region28: #{tpu_custom_call.1} parent=1 // pred_region
      %51 = dma.done [#allocation4], 8192
    $region29: #{tpu_custom_call.1} parent=1 // pred_fallthru
      _
    // Predicated region
    $region30: #{tpu_custom_call.1} parent=1 // pred_check
      _
    $region31: #{tpu_custom_call.1} parent=1 // pred_check_branch
      %53 = sbr.rel (0) target = $region33
    $region32: #{tpu_custom_call.1} parent=1 // pred_region
      %55 = dma.done [#allocation7], 2048
    $region33: #{tpu_custom_call.1} parent=1 // pred_fallthru
      _
    %v56 = vld [vmem:[%s0] sm:$0xff]
    %v57 = vld [vmem:[%s0 + $0x8] sm:$0xff]
    %v58 = vld [vmem:[%s0 + $0x10] sm:$0xff]
    %v59 = vld [vmem:[%s0 + $0x18] sm:$0xff]
    %v60 = vld [vmem:[%s0 + $0x20] sm:$0xff]
    %v61 = vld [vmem:[%s0 + $0x28] sm:$0xff]
    %v62 = vld [vmem:[%s0 + $0x30] sm:$0xff]
    %v63 = vld [vmem:[%s0 + $0x38] sm:$0xff]
    %v64 = vld [vmem:[%s1] sm:$0xff]
    %v65 = vld [vmem:[%s1 + $0x8] sm:$0xff]
    %v66 = vld [vmem:[%s1 + $0x10] sm:$0xff]
    %v67 = vld [vmem:[%s1 + $0x18] sm:$0xff]
    %v68 = vld [vmem:[%s1 + $0x20] sm:$0xff]
    %v69 = vld [vmem:[%s1 + $0x28] sm:$0xff]
    %v70 = vld [vmem:[%s1 + $0x30] sm:$0xff]
    %v71 = vld [vmem:[%s1 + $0x38] sm:$0xff]
    %v72 = vld [vmem:[%s3] sm:$0xf]
    %v74 = vperm.slane %v72, 0
    %v75 = vperm.slane %v72, 1
    %v76 = vperm.slane %v72, 2
    %v77 = vperm.slane %v72, 3
    %vm82 = vcmask 130048
    %v84 = vsel %vm82, %v56, 0
    %v87 = vsel %vm82, %v57, 0
    %v90 = vsel %vm82, %v58, 0
    %v93 = vsel %vm82, %v59, 0
    %v96 = vsel %vm82, %v60, 0
    %v99 = vsel %vm82, %v61, 0
    %v102 = vsel %vm82, %v62, 0
    %v105 = vsel %vm82, %v63, 0
    %107 = vmatpush.msra.mxu0 0.0
    %108 = vmatpush.msra.mxu0 0.0
    %109 = vmatpush.msra.mxu0 0.0
    %110 = vmatpush.msra.mxu0 0.0
    %111 = vmatpush.msra.mxu0 0.0
    %112 = vmatpush.msra.mxu0 0.0
    %113 = vmatpush.msra.mxu0 0.0
    %114 = vmatpush.msra.mxu0 0.0
    %115 = vmatpush.msra.mxu0 0.0
    %116 = vmatpush.msra.mxu0 0.0
    %117 = vmatpush.msra.mxu0 0.0
    %118 = vmatpush.msra.mxu0 0.0
    %119 = vmatpush.msra.mxu0 0.0
    %120 = vmatpush.msra.mxu0 0.0
    %121 = vmatpush.msra.mxu0 %v68
    %122 = vmatpush.msra.mxu0 %v64
    %123 = vmatmul.f32.gmra.mxu0 %v84
    %v124 = vpop.f32.mrf.mxu0
    %v125 = vadd.f32 %v74, %v124
    %126 = vmatmul.f32.gmra.mxu0 %v87
    %v127 = vpop.f32.mrf.mxu0
    %v128 = vadd.f32 %v74, %v127
    %129 = vmatmul.f32.gmra.mxu0 %v90
    %v130 = vpop.f32.mrf.mxu0
    %v131 = vadd.f32 %v74, %v130
    %132 = vmatmul.f32.gmra.mxu0 %v93
    %v133 = vpop.f32.mrf.mxu0
    %v134 = vadd.f32 %v74, %v133
    %135 = vmatmul.f32.gmra.mxu0 %v96
    %v136 = vpop.f32.mrf.mxu0
    %v137 = vadd.f32 %v74, %v136
    %138 = vmatmul.f32.gmra.mxu0 %v99
    %v139 = vpop.f32.mrf.mxu0
    %v140 = vadd.f32 %v74, %v139
    %141 = vmatmul.f32.gmra.mxu0 %v102
    %v142 = vpop.f32.mrf.mxu0
    %v143 = vadd.f32 %v74, %v142
    %144 = vmatmul.f32.gmra.mxu0 %v105
    %v145 = vpop.f32.mrf.mxu0
    %v146 = vadd.f32 %v74, %v145
    %147 = vdwg.mxu0
    %148 = vmatpush.msra.mxu0 0.0
    %149 = vmatpush.msra.mxu0 0.0
    %150 = vmatpush.msra.mxu0 0.0
    %151 = vmatpush.msra.mxu0 0.0
    %152 = vmatpush.msra.mxu0 0.0
    %153 = vmatpush.msra.mxu0 0.0
    %154 = vmatpush.msra.mxu0 0.0
    %155 = vmatpush.msra.mxu0 0.0
    %156 = vmatpush.msra.mxu0 0.0
    %157 = vmatpush.msra.mxu0 0.0
    %158 = vmatpush.msra.mxu0 0.0
    %159 = vmatpush.msra.mxu0 0.0
    %160 = vmatpush.msra.mxu0 0.0
    %161 = vmatpush.msra.mxu0 0.0
    %162 = vmatpush.msra.mxu0 %v69
    %163 = vmatpush.msra.mxu0 %v65
    %164 = vmatmul.f32.gmra.mxu0 %v84
    %v165 = vpop.f32.mrf.mxu0
    %v166 = vadd.f32 %v75, %v165
    %167 = vmatmul.f32.gmra.mxu0 %v87
    %v168 = vpop.f32.mrf.mxu0
    %v169 = vadd.f32 %v75, %v168
    %170 = vmatmul.f32.gmra.mxu0 %v90
    %v171 = vpop.f32.mrf.mxu0
    %v172 = vadd.f32 %v75, %v171
    %173 = vmatmul.f32.gmra.mxu0 %v93
    %v174 = vpop.f32.mrf.mxu0
    %v175 = vadd.f32 %v75, %v174
    %176 = vmatmul.f32.gmra.mxu0 %v96
    %v177 = vpop.f32.mrf.mxu0
    %v178 = vadd.f32 %v75, %v177
    %179 = vmatmul.f32.gmra.mxu0 %v99
    %v180 = vpop.f32.mrf.mxu0
    %v181 = vadd.f32 %v75, %v180
    %182 = vmatmul.f32.gmra.mxu0 %v102
    %v183 = vpop.f32.mrf.mxu0
    %v184 = vadd.f32 %v75, %v183
    %185 = vmatmul.f32.gmra.mxu0 %v105
    %v186 = vpop.f32.mrf.mxu0
    %v187 = vadd.f32 %v75, %v186
    %188 = vdwg.mxu0
    %189 = vmatpush.msra.mxu0 0.0
    %190 = vmatpush.msra.mxu0 0.0
    %191 = vmatpush.msra.mxu0 0.0
    %192 = vmatpush.msra.mxu0 0.0
    %193 = vmatpush.msra.mxu0 0.0
    %194 = vmatpush.msra.mxu0 0.0
    %195 = vmatpush.msra.mxu0 0.0
    %196 = vmatpush.msra.mxu0 0.0
    %197 = vmatpush.msra.mxu0 0.0
    %198 = vmatpush.msra.mxu0 0.0
    %199 = vmatpush.msra.mxu0 0.0
    %200 = vmatpush.msra.mxu0 0.0
    %201 = vmatpush.msra.mxu0 0.0
    %202 = vmatpush.msra.mxu0 0.0
    %203 = vmatpush.msra.mxu0 %v70
    %204 = vmatpush.msra.mxu0 %v66
    %205 = vmatmul.f32.gmra.mxu0 %v84
    %v206 = vpop.f32.mrf.mxu0
    %v207 = vadd.f32 %v76, %v206
    %208 = vmatmul.f32.gmra.mxu0 %v87
    %v209 = vpop.f32.mrf.mxu0
    %v210 = vadd.f32 %v76, %v209
    %211 = vmatmul.f32.gmra.mxu0 %v90
    %v212 = vpop.f32.mrf.mxu0
    %v213 = vadd.f32 %v76, %v212
    %214 = vmatmul.f32.gmra.mxu0 %v93
    %v215 = vpop.f32.mrf.mxu0
    %v216 = vadd.f32 %v76, %v215
    %217 = vmatmul.f32.gmra.mxu0 %v96
    %v218 = vpop.f32.mrf.mxu0
    %v219 = vadd.f32 %v76, %v218
    %220 = vmatmul.f32.gmra.mxu0 %v99
    %v221 = vpop.f32.mrf.mxu0
    %v222 = vadd.f32 %v76, %v221
    %223 = vmatmul.f32.gmra.mxu0 %v102
    %v224 = vpop.f32.mrf.mxu0
    %v225 = vadd.f32 %v76, %v224
    %226 = vmatmul.f32.gmra.mxu0 %v105
    %v227 = vpop.f32.mrf.mxu0
    %v228 = vadd.f32 %v76, %v227
    %229 = vdwg.mxu0
    %230 = vmatpush.msra.mxu0 0.0
    %231 = vmatpush.msra.mxu0 0.0
    %232 = vmatpush.msra.mxu0 0.0
    %233 = vmatpush.msra.mxu0 0.0
    %234 = vmatpush.msra.mxu0 0.0
    %235 = vmatpush.msra.mxu0 0.0
    %236 = vmatpush.msra.mxu0 0.0
    %237 = vmatpush.msra.mxu0 0.0
    %238 = vmatpush.msra.mxu0 0.0
    %239 = vmatpush.msra.mxu0 0.0
    %240 = vmatpush.msra.mxu0 0.0
    %241 = vmatpush.msra.mxu0 0.0
    %242 = vmatpush.msra.mxu0 0.0
    %243 = vmatpush.msra.mxu0 0.0
    %244 = vmatpush.msra.mxu0 %v71
    %245 = vmatpush.msra.mxu0 %v67
    %246 = vmatmul.f32.gmra.mxu0 %v84
    %v247 = vpop.f32.mrf.mxu0
    %v248 = vadd.f32 %v77, %v247
    %249 = vmatmul.f32.gmra.mxu0 %v87
    %v250 = vpop.f32.mrf.mxu0
    %v251 = vadd.f32 %v77, %v250
    %252 = vmatmul.f32.gmra.mxu0 %v90
    %v253 = vpop.f32.mrf.mxu0
    %v254 = vadd.f32 %v77, %v253
    %255 = vmatmul.f32.gmra.mxu0 %v93
    %v256 = vpop.f32.mrf.mxu0
    %v257 = vadd.f32 %v77, %v256
    %258 = vmatmul.f32.gmra.mxu0 %v96
    %v259 = vpop.f32.mrf.mxu0
    %v260 = vadd.f32 %v77, %v259
    %261 = vmatmul.f32.gmra.mxu0 %v99
    %v262 = vpop.f32.mrf.mxu0
    %v263 = vadd.f32 %v77, %v262
    %264 = vmatmul.f32.gmra.mxu0 %v102
    %v265 = vpop.f32.mrf.mxu0
    %v266 = vadd.f32 %v77, %v265
    %267 = vmatmul.f32.gmra.mxu0 %v105
    %v268 = vpop.f32.mrf.mxu0
    %v269 = vadd.f32 %v77, %v268
    %270 = vdwg.mxu0
    %271 = vst [vmem:[#allocation2] sm:$0xff] %v125
    %272 = vst [vmem:[#allocation2 + $0x8] sm:$0xff] %v166
    %273 = vst [vmem:[#allocation2 + $0x10] sm:$0xff] %v207
    %274 = vst [vmem:[#allocation2 + $0x18] sm:$0xff] %v248
    %275 = vst [vmem:[#allocation2 + $0x20] sm:$0xff] %v128
    %276 = vst [vmem:[#allocation2 + $0x28] sm:$0xff] %v169
    %277 = vst [vmem:[#allocation2 + $0x30] sm:$0xff] %v210
    %278 = vst [vmem:[#allocation2 + $0x38] sm:$0xff] %v251
    %279 = vst [vmem:[#allocation2 + $0x40] sm:$0xff] %v131
    %280 = vst [vmem:[#allocation2 + $0x48] sm:$0xff] %v172
    %281 = vst [vmem:[#allocation2 + $0x50] sm:$0xff] %v213
    %282 = vst [vmem:[#allocation2 + $0x58] sm:$0xff] %v254
    %283 = vst [vmem:[#allocation2 + $0x60] sm:$0xff] %v134
    %284 = vst [vmem:[#allocation2 + $0x68] sm:$0xff] %v175
    %285 = vst [vmem:[#allocation2 + $0x70] sm:$0xff] %v216
    %286 = vst [vmem:[#allocation2 + $0x78] sm:$0xff] %v257
    %287 = vst [vmem:[#allocation2 + $0x80] sm:$0xff] %v137
    %288 = vst [vmem:[#allocation2 + $0x88] sm:$0xff] %v178
    %289 = vst [vmem:[#allocation2 + $0x90] sm:$0xff] %v219
    %290 = vst [vmem:[#allocation2 + $0x98] sm:$0xff] %v260
    %291 = vst [vmem:[#allocation2 + $0xa0] sm:$0xff] %v140
    %292 = vst [vmem:[#allocation2 + $0xa8] sm:$0xff] %v181
    %293 = vst [vmem:[#allocation2 + $0xb0] sm:$0xff] %v222
    %294 = vst [vmem:[#allocation2 + $0xb8] sm:$0xff] %v263
    %295 = vst [vmem:[#allocation2 + $0xc0] sm:$0xff] %v143
    %296 = vst [vmem:[#allocation2 + $0xc8] sm:$0xff] %v184
    %297 = vst [vmem:[#allocation2 + $0xd0] sm:$0xff] %v225
    %298 = vst [vmem:[#allocation2 + $0xd8] sm:$0xff] %v266
    %299 = vst [vmem:[#allocation2 + $0xe0] sm:$0xff] %v146
    %300 = vst [vmem:[#allocation2 + $0xe8] sm:$0xff] %v187
    %301 = vst [vmem:[#allocation2 + $0xf0] sm:$0xff] %v228
    %302 = vst [vmem:[#allocation2 + $0xf8] sm:$0xff] %v269
    %v303 = vld [vmem:[#allocation3] sm:$0xff]
    %v304 = vld [vmem:[#allocation3 + $0x8] sm:$0xff]
    %v305 = vld [vmem:[#allocation3 + $0x10] sm:$0xff]
    %v306 = vld [vmem:[#allocation3 + $0x18] sm:$0xff]
    %v307 = vld [vmem:[#allocation3 + $0x20] sm:$0xff]
    %v308 = vld [vmem:[#allocation3 + $0x28] sm:$0xff]
    %v309 = vld [vmem:[#allocation3 + $0x30] sm:$0xff]
    %v310 = vld [vmem:[#allocation3 + $0x38] sm:$0xff]
    %v311 = vld [vmem:[#allocation3 + $0x40] sm:$0xff]
    %v312 = vld [vmem:[#allocation3 + $0x48] sm:$0xff]
    %v313 = vld [vmem:[#allocation3 + $0x50] sm:$0xff]
    %v314 = vld [vmem:[#allocation3 + $0x58] sm:$0xff]
    %v315 = vld [vmem:[#allocation3 + $0x60] sm:$0xff]
    %v316 = vld [vmem:[#allocation3 + $0x68] sm:$0xff]
    %v317 = vld [vmem:[#allocation3 + $0x70] sm:$0xff]
    %v318 = vld [vmem:[#allocation3 + $0x78] sm:$0xff]
    %v319 = vld [vmem:[#allocation3 + $0x80] sm:$0xff]
    %v320 = vld [vmem:[#allocation3 + $0x88] sm:$0xff]
    %v321 = vld [vmem:[#allocation3 + $0x90] sm:$0xff]
    %v322 = vld [vmem:[#allocation3 + $0x98] sm:$0xff]
    %v323 = vld [vmem:[#allocation3 + $0xa0] sm:$0xff]
    %v324 = vld [vmem:[#allocation3 + $0xa8] sm:$0xff]
    %v325 = vld [vmem:[#allocation3 + $0xb0] sm:$0xff]
    %v326 = vld [vmem:[#allocation3 + $0xb8] sm:$0xff]
    %v327 = vld [vmem:[#allocation3 + $0xc0] sm:$0xff]
    %v328 = vld [vmem:[#allocation3 + $0xc8] sm:$0xff]
    %v329 = vld [vmem:[#allocation3 + $0xd0] sm:$0xff]
    %v330 = vld [vmem:[#allocation3 + $0xd8] sm:$0xff]
    %v331 = vld [vmem:[#allocation3 + $0xe0] sm:$0xff]
    %v332 = vld [vmem:[#allocation3 + $0xe8] sm:$0xff]
    %v333 = vld [vmem:[#allocation3 + $0xf0] sm:$0xff]
    %v334 = vld [vmem:[#allocation3 + $0xf8] sm:$0xff]
    %v335 = vld [vmem:[#allocation3 + $0x100] sm:$0xff]
    %v336 = vld [vmem:[#allocation3 + $0x108] sm:$0xff]
    %v337 = vld [vmem:[#allocation3 + $0x110] sm:$0xff]
    %v338 = vld [vmem:[#allocation3 + $0x118] sm:$0xff]
    %v339 = vld [vmem:[#allocation3 + $0x120] sm:$0xff]
    %v340 = vld [vmem:[#allocation3 + $0x128] sm:$0xff]
    %v341 = vld [vmem:[#allocation3 + $0x130] sm:$0xff]
    %v342 = vld [vmem:[#allocation3 + $0x138] sm:$0xff]
    %v343 = vld [vmem:[#allocation3 + $0x140] sm:$0xff]
    %v344 = vld [vmem:[#allocation3 + $0x148] sm:$0xff]
    %v345 = vld [vmem:[#allocation3 + $0x150] sm:$0xff]
    %v346 = vld [vmem:[#allocation3 + $0x158] sm:$0xff]
    %v347 = vld [vmem:[#allocation3 + $0x160] sm:$0xff]
    %v348 = vld [vmem:[#allocation3 + $0x168] sm:$0xff]
    %v349 = vld [vmem:[#allocation3 + $0x170] sm:$0xff]
    %v350 = vld [vmem:[#allocation3 + $0x178] sm:$0xff]
    %v351 = vld [vmem:[#allocation3 + $0x180] sm:$0xff]
    %v352 = vld [vmem:[#allocation3 + $0x188] sm:$0xff]
    %v353 = vld [vmem:[#allocation3 + $0x190] sm:$0xff]
    %v354 = vld [vmem:[#allocation3 + $0x198] sm:$0xff]
    %v355 = vld [vmem:[#allocation3 + $0x1a0] sm:$0xff]
    %v356 = vld [vmem:[#allocation3 + $0x1a8] sm:$0xff]
    %v357 = vld [vmem:[#allocation3 + $0x1b0] sm:$0xff]
    %v358 = vld [vmem:[#allocation3 + $0x1b8] sm:$0xff]
    %v359 = vld [vmem:[#allocation3 + $0x1c0] sm:$0xff]
    %v360 = vld [vmem:[#allocation3 + $0x1c8] sm:$0xff]
    %v361 = vld [vmem:[#allocation3 + $0x1d0] sm:$0xff]
    %v362 = vld [vmem:[#allocation3 + $0x1d8] sm:$0xff]
    %v363 = vld [vmem:[#allocation3 + $0x1e0] sm:$0xff]
    %v364 = vld [vmem:[#allocation3 + $0x1e8] sm:$0xff]
    %v365 = vld [vmem:[#allocation3 + $0x1f0] sm:$0xff]
    %v366 = vld [vmem:[#allocation3 + $0x1f8] sm:$0xff]
    %v367 = vld [vmem:[#allocation2] sm:$0xff]
    %v368 = vld [vmem:[#allocation2 + $0x8] sm:$0xff]
    %v369 = vld [vmem:[#allocation2 + $0x10] sm:$0xff]
    %v370 = vld [vmem:[#allocation2 + $0x18] sm:$0xff]
    %371 = vmatpush.msra.mxu0 %v363
    %372 = vmatpush.msra.mxu0 %v359
    %373 = vmatpush.msra.mxu0 %v355
    %374 = vmatpush.msra.mxu0 %v351
    %375 = vmatpush.msra.mxu0 %v347
    %376 = vmatpush.msra.mxu0 %v343
    %377 = vmatpush.msra.mxu0 %v339
    %378 = vmatpush.msra.mxu0 %v335
    %379 = vmatpush.msra.mxu0 %v331
    %380 = vmatpush.msra.mxu0 %v327
    %381 = vmatpush.msra.mxu0 %v323
    %382 = vmatpush.msra.mxu0 %v319
    %383 = vmatpush.msra.mxu0 %v315
    %384 = vmatpush.msra.mxu0 %v311
    %385 = vmatpush.msra.mxu0 %v307
    %386 = vmatpush.msra.mxu0 %v303
    %387 = vmatmul.f32.gmra.mxu0 0.0
    %v388 = vpop.f32.mrf.mxu0
    %v389 = vadd.f32 0.0, %v388
    %390 = vdwg.mxu0
    %391 = vmatpush.msra.mxu0 %v364
    %392 = vmatpush.msra.mxu0 %v360
    %393 = vmatpush.msra.mxu0 %v356
    %394 = vmatpush.msra.mxu0 %v352
    %395 = vmatpush.msra.mxu0 %v348
    %396 = vmatpush.msra.mxu0 %v344
    %397 = vmatpush.msra.mxu0 %v340
    %398 = vmatpush.msra.mxu0 %v336
    %399 = vmatpush.msra.mxu0 %v332
    %400 = vmatpush.msra.mxu0 %v328
    %401 = vmatpush.msra.mxu0 %v324
    %402 = vmatpush.msra.mxu0 %v320
    %403 = vmatpush.msra.mxu0 %v316
    %404 = vmatpush.msra.mxu0 %v312
    %405 = vmatpush.msra.mxu0 %v308
    %406 = vmatpush.msra.mxu0 %v304
    %407 = vmatmul.f32.gmra.mxu0 0.0
    %v408 = vpop.f32.mrf.mxu0
    %v409 = vadd.f32 0.0, %v408
    %410 = vdwg.mxu0
    %411 = vmatpush.msra.mxu0 %v365
    %412 = vmatpush.msra.mxu0 %v361
    %413 = vmatpush.msra.mxu0 %v357
    %414 = vmatpush.msra.mxu0 %v353
    %415 = vmatpush.msra.mxu0 %v349
    %416 = vmatpush.msra.mxu0 %v345
    %417 = vmatpush.msra.mxu0 %v341
    %418 = vmatpush.msra.mxu0 %v337
    %419 = vmatpush.msra.mxu0 %v333
    %420 = vmatpush.msra.mxu0 %v329
    %421 = vmatpush.msra.mxu0 %v325
    %422 = vmatpush.msra.mxu0 %v321
    %423 = vmatpush.msra.mxu0 %v317
    %424 = vmatpush.msra.mxu0 %v313
    %425 = vmatpush.msra.mxu0 %v309
    %426 = vmatpush.msra.mxu0 %v305
    %427 = vmatmul.f32.gmra.mxu0 0.0
    %v428 = vpop.f32.mrf.mxu0
    %v429 = vadd.f32 0.0, %v428
    %430 = vdwg.mxu0
    %431 = vmatpush.msra.mxu0 %v366
    %432 = vmatpush.msra.mxu0 %v362
    %433 = vmatpush.msra.mxu0 %v358
    %434 = vmatpush.msra.mxu0 %v354
    %435 = vmatpush.msra.mxu0 %v350
    %436 = vmatpush.msra.mxu0 %v346
    %437 = vmatpush.msra.mxu0 %v342
    %438 = vmatpush.msra.mxu0 %v338
    %439 = vmatpush.msra.mxu0 %v334
    %440 = vmatpush.msra.mxu0 %v330
    %441 = vmatpush.msra.mxu0 %v326
    %442 = vmatpush.msra.mxu0 %v322
    %443 = vmatpush.msra.mxu0 %v318
    %444 = vmatpush.msra.mxu0 %v314
    %445 = vmatpush.msra.mxu0 %v310
    %446 = vmatpush.msra.mxu0 %v306
    %447 = vmatmul.f32.gmra.mxu0 0.0
    %v448 = vpop.f32.mrf.mxu0
    %v449 = vadd.f32 0.0, %v448
    %450 = vdwg.mxu0
    %v451 = vadd.f32 %v367, %v389
    %v452 = vadd.f32 %v368, %v409
    %v453 = vadd.f32 %v369, %v429
    %v454 = vadd.f32 %v370, %v449
    %v455 = vxor.u32 %v451, 2147483648
    %v456 = vmul.f32 %v455, 1.442695
    %v457 = vpow.pop %v456
    %v458 = vadd.f32 %v457, 1.0
    %v459 = vrcp.pop %v458
    %v460 = vmul.f32 %v458, %v459
    %v461 = vsub.f32 1.0, %v460
    %v462 = vmul.f32 %v459, %v461
    %v463 = vadd.f32 %v459, %v462
    %vm464 = vweird.f32 %v458
    %vm465 = vweird.f32 %v459
    %vm466 = vmor %vm464, %vm465
    %v467 = vsel %vm466, %v459, %v463
    %v468 = vand.u32 2147483647, %v458
    %vm469 = vcmp.eq.f32.partialorder %v468, 8.507059e+37
    %v470 = vand.u32 %v458, 2147483648
    %v471 = vor.u32 1.1754944e-38, %v470
    %v472 = vsel %vm469, %v471, %v467
    %v473 = vmul.f32 1.0, %v472
    %v474 = vxor.u32 %v452, 2147483648
    %v475 = vmul.f32 %v474, 1.442695
    %v476 = vpow.pop %v475
    %v477 = vadd.f32 %v476, 1.0
    %v478 = vrcp.pop %v477
    %v479 = vmul.f32 %v477, %v478
    %v480 = vsub.f32 1.0, %v479
    %v481 = vmul.f32 %v478, %v480
    %v482 = vadd.f32 %v478, %v481
    %vm483 = vweird.f32 %v477
    %vm484 = vweird.f32 %v478
    %vm485 = vmor %vm483, %vm484
    %v486 = vsel %vm485, %v478, %v482
    %v487 = vand.u32 2147483647, %v477
    %vm488 = vcmp.eq.f32.partialorder %v487, 8.507059e+37
    %v489 = vand.u32 %v477, 2147483648
    %v490 = vor.u32 1.1754944e-38, %v489
    %v491 = vsel %vm488, %v490, %v486
    %v492 = vmul.f32 1.0, %v491
    %v493 = vtanh.pop %v453
    %v494 = vxor.u32 %v454, 2147483648
    %v495 = vmul.f32 %v494, 1.442695
    %v496 = vpow.pop %v495
    %v497 = vadd.f32 %v496, 1.0
    %v498 = vrcp.pop %v497
    %v499 = vmul.f32 %v497, %v498
    %v500 = vsub.f32 1.0, %v499
    %v501 = vmul.f32 %v498, %v500
    %v502 = vadd.f32 %v498, %v501
    %vm503 = vweird.f32 %v497
    %vm504 = vweird.f32 %v498
    %vm505 = vmor %vm503, %vm504
    %v506 = vsel %vm505, %v498, %v502
    %v507 = vand.u32 2147483647, %v497
    %vm508 = vcmp.eq.f32.partialorder %v507, 8.507059e+37
    %v509 = vand.u32 %v497, 2147483648
    %v510 = vor.u32 1.1754944e-38, %v509
    %v511 = vsel %vm508, %v510, %v506
    %v512 = vmul.f32 1.0, %v511
    %v513 = vmul.f32 %v492, 0.0
    %v514 = vmul.f32 %v473, %v493
    %v515 = vadd.f32 %v513, %v514
    %v516 = vtanh.pop %v515
    %v517 = vmul.f32 %v512, %v516
    %v518 = vld [vmem:[#allocation2 + $0x20] sm:$0xff]
    %v519 = vld [vmem:[#allocation2 + $0x28] sm:$0xff]
    %v520 = vld [vmem:[#allocation2 + $0x30] sm:$0xff]
    %v521 = vld [vmem:[#allocation2 + $0x38] sm:$0xff]
    %522 = vmatpush.msra.mxu0 %v363
    %523 = vmatpush.msra.mxu0 %v359
    %524 = vmatpush.msra.mxu0 %v355
    %525 = vmatpush.msra.mxu0 %v351
    %526 = vmatpush.msra.mxu0 %v347
    %527 = vmatpush.msra.mxu0 %v343
    %528 = vmatpush.msra.mxu0 %v339
    %529 = vmatpush.msra.mxu0 %v335
    %530 = vmatpush.msra.mxu0 %v331
    %531 = vmatpush.msra.mxu0 %v327
    %532 = vmatpush.msra.mxu0 %v323
    %533 = vmatpush.msra.mxu0 %v319
    %534 = vmatpush.msra.mxu0 %v315
    %535 = vmatpush.msra.mxu0 %v311
    %536 = vmatpush.msra.mxu0 %v307
    %537 = vmatpush.msra.mxu0 %v303
    %538 = vmatmul.f32.gmra.mxu0 %v517
    %v539 = vpop.f32.mrf.mxu0
    %v540 = vadd.f32 0.0, %v539
    %541 = vdwg.mxu0
    %542 = vmatpush.msra.mxu0 %v364
    %543 = vmatpush.msra.mxu0 %v360
    %544 = vmatpush.msra.mxu0 %v356
    %545 = vmatpush.msra.mxu0 %v352
    %546 = vmatpush.msra.mxu0 %v348
    %547 = vmatpush.msra.mxu0 %v344
    %548 = vmatpush.msra.mxu0 %v340
    %549 = vmatpush.msra.mxu0 %v336
    %550 = vmatpush.msra.mxu0 %v332
    %551 = vmatpush.msra.mxu0 %v328
    %552 = vmatpush.msra.mxu0 %v324
    %553 = vmatpush.msra.mxu0 %v320
    %554 = vmatpush.msra.mxu0 %v316
    %555 = vmatpush.msra.mxu0 %v312
    %556 = vmatpush.msra.mxu0 %v308
    %557 = vmatpush.msra.mxu0 %v304
    %558 = vmatmul.f32.gmra.mxu0 %v517
    %v559 = vpop.f32.mrf.mxu0
    %v560 = vadd.f32 0.0, %v559
    %561 = vdwg.mxu0
    %562 = vmatpush.msra.mxu0 %v365
    %563 = vmatpush.msra.mxu0 %v361
    %564 = vmatpush.msra.mxu0 %v357
    %565 = vmatpush.msra.mxu0 %v353
    %566 = vmatpush.msra.mxu0 %v349
    %567 = vmatpush.msra.mxu0 %v345
    %568 = vmatpush.msra.mxu0 %v341
    %569 = vmatpush.msra.mxu0 %v337
    %570 = vmatpush.msra.mxu0 %v333
    %571 = vmatpush.msra.mxu0 %v329
    %572 = vmatpush.msra.mxu0 %v325
    %573 = vmatpush.msra.mxu0 %v321
    %574 = vmatpush.msra.mxu0 %v317
    %575 = vmatpush.msra.mxu0 %v313
    %576 = vmatpush.msra.mxu0 %v309
    %577 = vmatpush.msra.mxu0 %v305
    %578 = vmatmul.f32.gmra.mxu0 %v517
    %v579 = vpop.f32.mrf.mxu0
    %v580 = vadd.f32 0.0, %v579
    %581 = vdwg.mxu0
    %582 = vmatpush.msra.mxu0 %v366
    %583 = vmatpush.msra.mxu0 %v362
    %584 = vmatpush.msra.mxu0 %v358
    %585 = vmatpush.msra.mxu0 %v354
    %586 = vmatpush.msra.mxu0 %v350
    %587 = vmatpush.msra.mxu0 %v346
    %588 = vmatpush.msra.mxu0 %v342
    %589 = vmatpush.msra.mxu0 %v338
    %590 = vmatpush.msra.mxu0 %v334
    %591 = vmatpush.msra.mxu0 %v330
    %592 = vmatpush.msra.mxu0 %v326
    %593 = vmatpush.msra.mxu0 %v322
    %594 = vmatpush.msra.mxu0 %v318
    %595 = vmatpush.msra.mxu0 %v314
    %596 = vmatpush.msra.mxu0 %v310
    %597 = vmatpush.msra.mxu0 %v306
    %598 = vmatmul.f32.gmra.mxu0 %v517
    %v599 = vpop.f32.mrf.mxu0
    %v600 = vadd.f32 0.0, %v599
    %601 = vdwg.mxu0
    %v602 = vadd.f32 %v518, %v540
    %v603 = vadd.f32 %v519, %v560
    %v604 = vadd.f32 %v520, %v580
    %v605 = vadd.f32 %v521, %v600
    %v606 = vxor.u32 %v602, 2147483648
    %v607 = vmul.f32 %v606, 1.442695
    %v608 = vpow.pop %v607
    %v609 = vadd.f32 %v608, 1.0
    %v610 = vrcp.pop %v609
    %v611 = vmul.f32 %v609, %v610
    %v612 = vsub.f32 1.0, %v611
    %v613 = vmul.f32 %v610, %v612
    %v614 = vadd.f32 %v610, %v613
    %vm615 = vweird.f32 %v609
    %vm616 = vweird.f32 %v610
    %vm617 = vmor %vm615, %vm616
    %v618 = vsel %vm617, %v610, %v614
    %v619 = vand.u32 2147483647, %v609
    %vm620 = vcmp.eq.f32.partialorder %v619, 8.507059e+37
    %v621 = vand.u32 %v609, 2147483648
    %v622 = vor.u32 1.1754944e-38, %v621
    %v623 = vsel %vm620, %v622, %v618
    %v624 = vmul.f32 1.0, %v623
    %v625 = vxor.u32 %v603, 2147483648
    %v626 = vmul.f32 %v625, 1.442695
    %v627 = vpow.pop %v626
    %v628 = vadd.f32 %v627, 1.0
    %v629 = vrcp.pop %v628
    %v630 = vmul.f32 %v628, %v629
    %v631 = vsub.f32 1.0, %v630
    %v632 = vmul.f32 %v629, %v631
    %v633 = vadd.f32 %v629, %v632
    %vm634 = vweird.f32 %v628
    %vm635 = vweird.f32 %v629
    %vm636 = vmor %vm634, %vm635
    %v637 = vsel %vm636, %v629, %v633
    %v638 = vand.u32 2147483647, %v628
    %vm639 = vcmp.eq.f32.partialorder %v638, 8.507059e+37
    %v640 = vand.u32 %v628, 2147483648
    %v641 = vor.u32 1.1754944e-38, %v640
    %v642 = vsel %vm639, %v641, %v637
    %v643 = vmul.f32 1.0, %v642
    %v644 = vtanh.pop %v604
    %v645 = vxor.u32 %v605, 2147483648
    %v646 = vmul.f32 %v645, 1.442695
    %v647 = vpow.pop %v646
    %v648 = vadd.f32 %v647, 1.0
    %v649 = vrcp.pop %v648
    %v650 = vmul.f32 %v648, %v649
    %v651 = vsub.f32 1.0, %v650
    %v652 = vmul.f32 %v649, %v651
    %v653 = vadd.f32 %v649, %v652
    %vm654 = vweird.f32 %v648
    %vm655 = vweird.f32 %v649
    %vm656 = vmor %vm654, %vm655
    %v657 = vsel %vm656, %v649, %v653
    %v658 = vand.u32 2147483647, %v648
    %vm659 = vcmp.eq.f32.partialorder %v658, 8.507059e+37
    %v660 = vand.u32 %v648, 2147483648
    %v661 = vor.u32 1.1754944e-38, %v660
    %v662 = vsel %vm659, %v661, %v657
    %v663 = vmul.f32 1.0, %v662
    %v664 = vmul.f32 %v643, %v515
    %v665 = vmul.f32 %v624, %v644
    %v666 = vadd.f32 %v664, %v665
    %v667 = vtanh.pop %v666
    %v668 = vmul.f32 %v663, %v667
    %v669 = vld [vmem:[#allocation2 + $0x40] sm:$0xff]
    %v670 = vld [vmem:[#allocation2 + $0x48] sm:$0xff]
    %v671 = vld [vmem:[#allocation2 + $0x50] sm:$0xff]
    %v672 = vld [vmem:[#allocation2 + $0x58] sm:$0xff]
    %673 = vmatpush.msra.mxu0 %v363
    %674 = vmatpush.msra.mxu0 %v359
    %675 = vmatpush.msra.mxu0 %v355
    %676 = vmatpush.msra.mxu0 %v351
    %677 = vmatpush.msra.mxu0 %v347
    %678 = vmatpush.msra.mxu0 %v343
    %679 = vmatpush.msra.mxu0 %v339
    %680 = vmatpush.msra.mxu0 %v335
    %681 = vmatpush.msra.mxu0 %v331
    %682 = vmatpush.msra.mxu0 %v327
    %683 = vmatpush.msra.mxu0 %v323
    %684 = vmatpush.msra.mxu0 %v319
    %685 = vmatpush.msra.mxu0 %v315
    %686 = vmatpush.msra.mxu0 %v311
    %687 = vmatpush.msra.mxu0 %v307
    %688 = vmatpush.msra.mxu0 %v303
    %689 = vmatmul.f32.gmra.mxu0 %v668
    %v690 = vpop.f32.mrf.mxu0
    %v691 = vadd.f32 0.0, %v690
    %692 = vdwg.mxu0
    %693 = vmatpush.msra.mxu0 %v364
    %694 = vmatpush.msra.mxu0 %v360
    %695 = vmatpush.msra.mxu0 %v356
    %696 = vmatpush.msra.mxu0 %v352
    %697 = vmatpush.msra.mxu0 %v348
    %698 = vmatpush.msra.mxu0 %v344
    %699 = vmatpush.msra.mxu0 %v340
    %700 = vmatpush.msra.mxu0 %v336
    %701 = vmatpush.msra.mxu0 %v332
    %702 = vmatpush.msra.mxu0 %v328
    %703 = vmatpush.msra.mxu0 %v324
    %704 = vmatpush.msra.mxu0 %v320
    %705 = vmatpush.msra.mxu0 %v316
    %706 = vmatpush.msra.mxu0 %v312
    %707 = vmatpush.msra.mxu0 %v308
    %708 = vmatpush.msra.mxu0 %v304
    %709 = vmatmul.f32.gmra.mxu0 %v668
    %v710 = vpop.f32.mrf.mxu0
    %v711 = vadd.f32 0.0, %v710
    %712 = vdwg.mxu0
    %713 = vmatpush.msra.mxu0 %v365
    %714 = vmatpush.msra.mxu0 %v361
    %715 = vmatpush.msra.mxu0 %v357
    %716 = vmatpush.msra.mxu0 %v353
    %717 = vmatpush.msra.mxu0 %v349
    %718 = vmatpush.msra.mxu0 %v345
    %719 = vmatpush.msra.mxu0 %v341
    %720 = vmatpush.msra.mxu0 %v337
    %721 = vmatpush.msra.mxu0 %v333
    %722 = vmatpush.msra.mxu0 %v329
    %723 = vmatpush.msra.mxu0 %v325
    %724 = vmatpush.msra.mxu0 %v321
    %725 = vmatpush.msra.mxu0 %v317
    %726 = vmatpush.msra.mxu0 %v313
    %727 = vmatpush.msra.mxu0 %v309
    %728 = vmatpush.msra.mxu0 %v305
    %729 = vmatmul.f32.gmra.mxu0 %v668
    %v730 = vpop.f32.mrf.mxu0
    %v731 = vadd.f32 0.0, %v730
    %732 = vdwg.mxu0
    %733 = vmatpush.msra.mxu0 %v366
    %734 = vmatpush.msra.mxu0 %v362
    %735 = vmatpush.msra.mxu0 %v358
    %736 = vmatpush.msra.mxu0 %v354
    %737 = vmatpush.msra.mxu0 %v350
    %738 = vmatpush.msra.mxu0 %v346
    %739 = vmatpush.msra.mxu0 %v342
    %740 = vmatpush.msra.mxu0 %v338
    %741 = vmatpush.msra.mxu0 %v334
    %742 = vmatpush.msra.mxu0 %v330
    %743 = vmatpush.msra.mxu0 %v326
    %744 = vmatpush.msra.mxu0 %v322
    %745 = vmatpush.msra.mxu0 %v318
    %746 = vmatpush.msra.mxu0 %v314
    %747 = vmatpush.msra.mxu0 %v310
    %748 = vmatpush.msra.mxu0 %v306
    %749 = vmatmul.f32.gmra.mxu0 %v668
    %v750 = vpop.f32.mrf.mxu0
    %v751 = vadd.f32 0.0, %v750
    %752 = vdwg.mxu0
    %v753 = vadd.f32 %v669, %v691
    %v754 = vadd.f32 %v670, %v711
    %v755 = vadd.f32 %v671, %v731
    %v756 = vadd.f32 %v672, %v751
    %v757 = vxor.u32 %v753, 2147483648
    %v758 = vmul.f32 %v757, 1.442695
    %v759 = vpow.pop %v758
    %v760 = vadd.f32 %v759, 1.0
    %v761 = vrcp.pop %v760
    %v762 = vmul.f32 %v760, %v761
    %v763 = vsub.f32 1.0, %v762
    %v764 = vmul.f32 %v761, %v763
    %v765 = vadd.f32 %v761, %v764
    %vm766 = vweird.f32 %v760
    %vm767 = vweird.f32 %v761
    %vm768 = vmor %vm766, %vm767
    %v769 = vsel %vm768, %v761, %v765
    %v770 = vand.u32 2147483647, %v760
    %vm771 = vcmp.eq.f32.partialorder %v770, 8.507059e+37
    %v772 = vand.u32 %v760, 2147483648
    %v773 = vor.u32 1.1754944e-38, %v772
    %v774 = vsel %vm771, %v773, %v769
    %v775 = vmul.f32 1.0, %v774
    %v776 = vxor.u32 %v754, 2147483648
    %v777 = vmul.f32 %v776, 1.442695
    %v778 = vpow.pop %v777
    %v779 = vadd.f32 %v778, 1.0
    %v780 = vrcp.pop %v779
    %v781 = vmul.f32 %v779, %v780
    %v782 = vsub.f32 1.0, %v781
    %v783 = vmul.f32 %v780, %v782
    %v784 = vadd.f32 %v780, %v783
    %vm785 = vweird.f32 %v779
    %vm786 = vweird.f32 %v780
    %vm787 = vmor %vm785, %vm786
    %v788 = vsel %vm787, %v780, %v784
    %v789 = vand.u32 2147483647, %v779
    %vm790 = vcmp.eq.f32.partialorder %v789, 8.507059e+37
    %v791 = vand.u32 %v779, 2147483648
    %v792 = vor.u32 1.1754944e-38, %v791
    %v793 = vsel %vm790, %v792, %v788
    %v794 = vmul.f32 1.0, %v793
    %v795 = vtanh.pop %v755
    %v796 = vxor.u32 %v756, 2147483648
    %v797 = vmul.f32 %v796, 1.442695
    %v798 = vpow.pop %v797
    %v799 = vadd.f32 %v798, 1.0
    %v800 = vrcp.pop %v799
    %v801 = vmul.f32 %v799, %v800
    %v802 = vsub.f32 1.0, %v801
    %v803 = vmul.f32 %v800, %v802
    %v804 = vadd.f32 %v800, %v803
    %vm805 = vweird.f32 %v799
    %vm806 = vweird.f32 %v800
    %vm807 = vmor %vm805, %vm806
    %v808 = vsel %vm807, %v800, %v804
    %v809 = vand.u32 2147483647, %v799
    %vm810 = vcmp.eq.f32.partialorder %v809, 8.507059e+37
    %v811 = vand.u32 %v799, 2147483648
    %v812 = vor.u32 1.1754944e-38, %v811
    %v813 = vsel %vm810, %v812, %v808
    %v814 = vmul.f32 1.0, %v813
    %v815 = vmul.f32 %v794, %v666
    %v816 = vmul.f32 %v775, %v795
    %v817 = vadd.f32 %v815, %v816
    %v818 = vtanh.pop %v817
    %v819 = vmul.f32 %v814, %v818
    %v820 = vld [vmem:[#allocation2 + $0x60] sm:$0xff]
    %v821 = vld [vmem:[#allocation2 + $0x68] sm:$0xff]
    %v822 = vld [vmem:[#allocation2 + $0x70] sm:$0xff]
    %v823 = vld [vmem:[#allocation2 + $0x78] sm:$0xff]
    %824 = vmatpush.msra.mxu0 %v363
    %825 = vmatpush.msra.mxu0 %v359
    %826 = vmatpush.msra.mxu0 %v355
    %827 = vmatpush.msra.mxu0 %v351
    %828 = vmatpush.msra.mxu0 %v347
    %829 = vmatpush.msra.mxu0 %v343
    %830 = vmatpush.msra.mxu0 %v339
    %831 = vmatpush.msra.mxu0 %v335
    %832 = vmatpush.msra.mxu0 %v331
    %833 = vmatpush.msra.mxu0 %v327
    %834 = vmatpush.msra.mxu0 %v323
    %835 = vmatpush.msra.mxu0 %v319
    %836 = vmatpush.msra.mxu0 %v315
    %837 = vmatpush.msra.mxu0 %v311
    %838 = vmatpush.msra.mxu0 %v307
    %839 = vmatpush.msra.mxu0 %v303
    %840 = vmatmul.f32.gmra.mxu0 %v819
    %v841 = vpop.f32.mrf.mxu0
    %v842 = vadd.f32 0.0, %v841
    %843 = vdwg.mxu0
    %844 = vmatpush.msra.mxu0 %v364
    %845 = vmatpush.msra.mxu0 %v360
    %846 = vmatpush.msra.mxu0 %v356
    %847 = vmatpush.msra.mxu0 %v352
    %848 = vmatpush.msra.mxu0 %v348
    %849 = vmatpush.msra.mxu0 %v344
    %850 = vmatpush.msra.mxu0 %v340
    %851 = vmatpush.msra.mxu0 %v336
    %852 = vmatpush.msra.mxu0 %v332
    %853 = vmatpush.msra.mxu0 %v328
    %854 = vmatpush.msra.mxu0 %v324
    %855 = vmatpush.msra.mxu0 %v320
    %856 = vmatpush.msra.mxu0 %v316
    %857 = vmatpush.msra.mxu0 %v312
    %858 = vmatpush.msra.mxu0 %v308
    %859 = vmatpush.msra.mxu0 %v304
    %860 = vmatmul.f32.gmra.mxu0 %v819
    %v861 = vpop.f32.mrf.mxu0
    %v862 = vadd.f32 0.0, %v861
    %863 = vdwg.mxu0
    %864 = vmatpush.msra.mxu0 %v365
    %865 = vmatpush.msra.mxu0 %v361
    %866 = vmatpush.msra.mxu0 %v357
    %867 = vmatpush.msra.mxu0 %v353
    %868 = vmatpush.msra.mxu0 %v349
    %869 = vmatpush.msra.mxu0 %v345
    %870 = vmatpush.msra.mxu0 %v341
    %871 = vmatpush.msra.mxu0 %v337
    %872 = vmatpush.msra.mxu0 %v333
    %873 = vmatpush.msra.mxu0 %v329
    %874 = vmatpush.msra.mxu0 %v325
    %875 = vmatpush.msra.mxu0 %v321
    %876 = vmatpush.msra.mxu0 %v317
    %877 = vmatpush.msra.mxu0 %v313
    %878 = vmatpush.msra.mxu0 %v309
    %879 = vmatpush.msra.mxu0 %v305
    %880 = vmatmul.f32.gmra.mxu0 %v819
    %v881 = vpop.f32.mrf.mxu0
    %v882 = vadd.f32 0.0, %v881
    %883 = vdwg.mxu0
    %884 = vmatpush.msra.mxu0 %v366
    %885 = vmatpush.msra.mxu0 %v362
    %886 = vmatpush.msra.mxu0 %v358
    %887 = vmatpush.msra.mxu0 %v354
    %888 = vmatpush.msra.mxu0 %v350
    %889 = vmatpush.msra.mxu0 %v346
    %890 = vmatpush.msra.mxu0 %v342
    %891 = vmatpush.msra.mxu0 %v338
    %892 = vmatpush.msra.mxu0 %v334
    %893 = vmatpush.msra.mxu0 %v330
    %894 = vmatpush.msra.mxu0 %v326
    %895 = vmatpush.msra.mxu0 %v322
    %896 = vmatpush.msra.mxu0 %v318
    %897 = vmatpush.msra.mxu0 %v314
    %898 = vmatpush.msra.mxu0 %v310
    %899 = vmatpush.msra.mxu0 %v306
    %900 = vmatmul.f32.gmra.mxu0 %v819
    %v901 = vpop.f32.mrf.mxu0
    %v902 = vadd.f32 0.0, %v901
    %903 = vdwg.mxu0
    %v904 = vadd.f32 %v820, %v842
    %v905 = vadd.f32 %v821, %v862
    %v906 = vadd.f32 %v822, %v882
    %v907 = vadd.f32 %v823, %v902
    %v908 = vxor.u32 %v904, 2147483648
    %v909 = vmul.f32 %v908, 1.442695
    %v910 = vpow.pop %v909
    %v911 = vadd.f32 %v910, 1.0
    %v912 = vrcp.pop %v911
    %v913 = vmul.f32 %v911, %v912
    %v914 = vsub.f32 1.0, %v913
    %v915 = vmul.f32 %v912, %v914
    %v916 = vadd.f32 %v912, %v915
    %vm917 = vweird.f32 %v911
    %vm918 = vweird.f32 %v912
    %vm919 = vmor %vm917, %vm918
    %v920 = vsel %vm919, %v912, %v916
    %v921 = vand.u32 2147483647, %v911
    %vm922 = vcmp.eq.f32.partialorder %v921, 8.507059e+37
    %v923 = vand.u32 %v911, 2147483648
    %v924 = vor.u32 1.1754944e-38, %v923
    %v925 = vsel %vm922, %v924, %v920
    %v926 = vmul.f32 1.0, %v925
    %v927 = vxor.u32 %v905, 2147483648
    %v928 = vmul.f32 %v927, 1.442695
    %v929 = vpow.pop %v928
    %v930 = vadd.f32 %v929, 1.0
    %v931 = vrcp.pop %v930
    %v932 = vmul.f32 %v930, %v931
    %v933 = vsub.f32 1.0, %v932
    %v934 = vmul.f32 %v931, %v933
    %v935 = vadd.f32 %v931, %v934
    %vm936 = vweird.f32 %v930
    %vm937 = vweird.f32 %v931
    %vm938 = vmor %vm936, %vm937
    %v939 = vsel %vm938, %v931, %v935
    %v940 = vand.u32 2147483647, %v930
    %vm941 = vcmp.eq.f32.partialorder %v940, 8.507059e+37
    %v942 = vand.u32 %v930, 2147483648
    %v943 = vor.u32 1.1754944e-38, %v942
    %v944 = vsel %vm941, %v943, %v939
    %v945 = vmul.f32 1.0, %v944
    %v946 = vtanh.pop %v906
    %v947 = vxor.u32 %v907, 2147483648
    %v948 = vmul.f32 %v947, 1.442695
    %v949 = vpow.pop %v948
    %v950 = vadd.f32 %v949, 1.0
    %v951 = vrcp.pop %v950
    %v952 = vmul.f32 %v950, %v951
    %v953 = vsub.f32 1.0, %v952
    %v954 = vmul.f32 %v951, %v953
    %v955 = vadd.f32 %v951, %v954
    %vm956 = vweird.f32 %v950
    %vm957 = vweird.f32 %v951
    %vm958 = vmor %vm956, %vm957
    %v959 = vsel %vm958, %v951, %v955
    %v960 = vand.u32 2147483647, %v950
    %vm961 = vcmp.eq.f32.partialorder %v960, 8.507059e+37
    %v962 = vand.u32 %v950, 2147483648
    %v963 = vor.u32 1.1754944e-38, %v962
    %v964 = vsel %vm961, %v963, %v959
    %v965 = vmul.f32 1.0, %v964
    %v966 = vmul.f32 %v945, %v817
    %v967 = vmul.f32 %v926, %v946
    %v968 = vadd.f32 %v966, %v967
    %v969 = vtanh.pop %v968
    %v970 = vmul.f32 %v965, %v969
    %v971 = vld [vmem:[#allocation2 + $0x80] sm:$0xff]
    %v972 = vld [vmem:[#allocation2 + $0x88] sm:$0xff]
    %v973 = vld [vmem:[#allocation2 + $0x90] sm:$0xff]
    %v974 = vld [vmem:[#allocation2 + $0x98] sm:$0xff]
    %975 = vmatpush.msra.mxu0 %v363
    %976 = vmatpush.msra.mxu0 %v359
    %977 = vmatpush.msra.mxu0 %v355
    %978 = vmatpush.msra.mxu0 %v351
    %979 = vmatpush.msra.mxu0 %v347
    %980 = vmatpush.msra.mxu0 %v343
    %981 = vmatpush.msra.mxu0 %v339
    %982 = vmatpush.msra.mxu0 %v335
    %983 = vmatpush.msra.mxu0 %v331
    %984 = vmatpush.msra.mxu0 %v327
    %985 = vmatpush.msra.mxu0 %v323
    %986 = vmatpush.msra.mxu0 %v319
    %987 = vmatpush.msra.mxu0 %v315
    %988 = vmatpush.msra.mxu0 %v311
    %989 = vmatpush.msra.mxu0 %v307
    %990 = vmatpush.msra.mxu0 %v303
    %991 = vmatmul.f32.gmra.mxu0 %v970
    %v992 = vpop.f32.mrf.mxu0
    %v993 = vadd.f32 0.0, %v992
    %994 = vdwg.mxu0
    %995 = vmatpush.msra.mxu0 %v364
    %996 = vmatpush.msra.mxu0 %v360
    %997 = vmatpush.msra.mxu0 %v356
    %998 = vmatpush.msra.mxu0 %v352
    %999 = vmatpush.msra.mxu0 %v348
    %1000 = vmatpush.msra.mxu0 %v344
    %1001 = vmatpush.msra.mxu0 %v340
    %1002 = vmatpush.msra.mxu0 %v336
    %1003 = vmatpush.msra.mxu0 %v332
    %1004 = vmatpush.msra.mxu0 %v328
    %1005 = vmatpush.msra.mxu0 %v324
    %1006 = vmatpush.msra.mxu0 %v320
    %1007 = vmatpush.msra.mxu0 %v316
    %1008 = vmatpush.msra.mxu0 %v312
    %1009 = vmatpush.msra.mxu0 %v308
    %1010 = vmatpush.msra.mxu0 %v304
    %1011 = vmatmul.f32.gmra.mxu0 %v970
    %v1012 = vpop.f32.mrf.mxu0
    %v1013 = vadd.f32 0.0, %v1012
    %1014 = vdwg.mxu0
    %1015 = vmatpush.msra.mxu0 %v365
    %1016 = vmatpush.msra.mxu0 %v361
    %1017 = vmatpush.msra.mxu0 %v357
    %1018 = vmatpush.msra.mxu0 %v353
    %1019 = vmatpush.msra.mxu0 %v349
    %1020 = vmatpush.msra.mxu0 %v345
    %1021 = vmatpush.msra.mxu0 %v341
    %1022 = vmatpush.msra.mxu0 %v337
    %1023 = vmatpush.msra.mxu0 %v333
    %1024 = vmatpush.msra.mxu0 %v329
    %1025 = vmatpush.msra.mxu0 %v325
    %1026 = vmatpush.msra.mxu0 %v321
    %1027 = vmatpush.msra.mxu0 %v317
    %1028 = vmatpush.msra.mxu0 %v313
    %1029 = vmatpush.msra.mxu0 %v309
    %1030 = vmatpush.msra.mxu0 %v305
    %1031 = vmatmul.f32.gmra.mxu0 %v970
    %v1032 = vpop.f32.mrf.mxu0
    %v1033 = vadd.f32 0.0, %v1032
    %1034 = vdwg.mxu0
    %1035 = vmatpush.msra.mxu0 %v366
    %1036 = vmatpush.msra.mxu0 %v362
    %1037 = vmatpush.msra.mxu0 %v358
    %1038 = vmatpush.msra.mxu0 %v354
    %1039 = vmatpush.msra.mxu0 %v350
    %1040 = vmatpush.msra.mxu0 %v346
    %1041 = vmatpush.msra.mxu0 %v342
    %1042 = vmatpush.msra.mxu0 %v338
    %1043 = vmatpush.msra.mxu0 %v334
    %1044 = vmatpush.msra.mxu0 %v330
    %1045 = vmatpush.msra.mxu0 %v326
    %1046 = vmatpush.msra.mxu0 %v322
    %1047 = vmatpush.msra.mxu0 %v318
    %1048 = vmatpush.msra.mxu0 %v314
    %1049 = vmatpush.msra.mxu0 %v310
    %1050 = vmatpush.msra.mxu0 %v306
    %1051 = vmatmul.f32.gmra.mxu0 %v970
    %v1052 = vpop.f32.mrf.mxu0
    %v1053 = vadd.f32 0.0, %v1052
    %1054 = vdwg.mxu0
    %v1055 = vadd.f32 %v971, %v993
    %v1056 = vadd.f32 %v972, %v1013
    %v1057 = vadd.f32 %v973, %v1033
    %v1058 = vadd.f32 %v974, %v1053
    %v1059 = vxor.u32 %v1055, 2147483648
    %v1060 = vmul.f32 %v1059, 1.442695
    %v1061 = vpow.pop %v1060
    %v1062 = vadd.f32 %v1061, 1.0
    %v1063 = vrcp.pop %v1062
    %v1064 = vmul.f32 %v1062, %v1063
    %v1065 = vsub.f32 1.0, %v1064
    %v1066 = vmul.f32 %v1063, %v1065
    %v1067 = vadd.f32 %v1063, %v1066
    %vm1068 = vweird.f32 %v1062
    %vm1069 = vweird.f32 %v1063
    %vm1070 = vmor %vm1068, %vm1069
    %v1071 = vsel %vm1070, %v1063, %v1067
    %v1072 = vand.u32 2147483647, %v1062
    %vm1073 = vcmp.eq.f32.partialorder %v1072, 8.507059e+37
    %v1074 = vand.u32 %v1062, 2147483648
    %v1075 = vor.u32 1.1754944e-38, %v1074
    %v1076 = vsel %vm1073, %v1075, %v1071
    %v1077 = vmul.f32 1.0, %v1076
    %v1078 = vxor.u32 %v1056, 2147483648
    %v1079 = vmul.f32 %v1078, 1.442695
    %v1080 = vpow.pop %v1079
    %v1081 = vadd.f32 %v1080, 1.0
    %v1082 = vrcp.pop %v1081
    %v1083 = vmul.f32 %v1081, %v1082
    %v1084 = vsub.f32 1.0, %v1083
    %v1085 = vmul.f32 %v1082, %v1084
    %v1086 = vadd.f32 %v1082, %v1085
    %vm1087 = vweird.f32 %v1081
    %vm1088 = vweird.f32 %v1082
    %vm1089 = vmor %vm1087, %vm1088
    %v1090 = vsel %vm1089, %v1082, %v1086
    %v1091 = vand.u32 2147483647, %v1081
    %vm1092 = vcmp.eq.f32.partialorder %v1091, 8.507059e+37
    %v1093 = vand.u32 %v1081, 2147483648
    %v1094 = vor.u32 1.1754944e-38, %v1093
    %v1095 = vsel %vm1092, %v1094, %v1090
    %v1096 = vmul.f32 1.0, %v1095
    %v1097 = vtanh.pop %v1057
    %v1098 = vxor.u32 %v1058, 2147483648
    %v1099 = vmul.f32 %v1098, 1.442695
    %v1100 = vpow.pop %v1099
    %v1101 = vadd.f32 %v1100, 1.0
    %v1102 = vrcp.pop %v1101
    %v1103 = vmul.f32 %v1101, %v1102
    %v1104 = vsub.f32 1.0, %v1103
    %v1105 = vmul.f32 %v1102, %v1104
    %v1106 = vadd.f32 %v1102, %v1105
    %vm1107 = vweird.f32 %v1101
    %vm1108 = vweird.f32 %v1102
    %vm1109 = vmor %vm1107, %vm1108
    %v1110 = vsel %vm1109, %v1102, %v1106
    %v1111 = vand.u32 2147483647, %v1101
    %vm1112 = vcmp.eq.f32.partialorder %v1111, 8.507059e+37
    %v1113 = vand.u32 %v1101, 2147483648
    %v1114 = vor.u32 1.1754944e-38, %v1113
    %v1115 = vsel %vm1112, %v1114, %v1110
    %v1116 = vmul.f32 1.0, %v1115
    %v1117 = vmul.f32 %v1096, %v968
    %v1118 = vmul.f32 %v1077, %v1097
    %v1119 = vadd.f32 %v1117, %v1118
    %v1120 = vtanh.pop %v1119
    %v1121 = vmul.f32 %v1116, %v1120
    %v1122 = vld [vmem:[#allocation2 + $0xa0] sm:$0xff]
    %v1123 = vld [vmem:[#allocation2 + $0xa8] sm:$0xff]
    %v1124 = vld [vmem:[#allocation2 + $0xb0] sm:$0xff]
    %v1125 = vld [vmem:[#allocation2 + $0xb8] sm:$0xff]
    %1126 = vmatpush.msra.mxu0 %v363
    %1127 = vmatpush.msra.mxu0 %v359
    %1128 = vmatpush.msra.mxu0 %v355
    %1129 = vmatpush.msra.mxu0 %v351
    %1130 = vmatpush.msra.mxu0 %v347
    %1131 = vmatpush.msra.mxu0 %v343
    %1132 = vmatpush.msra.mxu0 %v339
    %1133 = vmatpush.msra.mxu0 %v335
    %1134 = vmatpush.msra.mxu0 %v331
    %1135 = vmatpush.msra.mxu0 %v327
    %1136 = vmatpush.msra.mxu0 %v323
    %1137 = vmatpush.msra.mxu0 %v319
    %1138 = vmatpush.msra.mxu0 %v315
    %1139 = vmatpush.msra.mxu0 %v311
    %1140 = vmatpush.msra.mxu0 %v307
    %1141 = vmatpush.msra.mxu0 %v303
    %1142 = vmatmul.f32.gmra.mxu0 %v1121
    %v1143 = vpop.f32.mrf.mxu0
    %v1144 = vadd.f32 0.0, %v1143
    %1145 = vdwg.mxu0
    %1146 = vmatpush.msra.mxu0 %v364
    %1147 = vmatpush.msra.mxu0 %v360
    %1148 = vmatpush.msra.mxu0 %v356
    %1149 = vmatpush.msra.mxu0 %v352
    %1150 = vmatpush.msra.mxu0 %v348
    %1151 = vmatpush.msra.mxu0 %v344
    %1152 = vmatpush.msra.mxu0 %v340
    %1153 = vmatpush.msra.mxu0 %v336
    %1154 = vmatpush.msra.mxu0 %v332
    %1155 = vmatpush.msra.mxu0 %v328
    %1156 = vmatpush.msra.mxu0 %v324
    %1157 = vmatpush.msra.mxu0 %v320
    %1158 = vmatpush.msra.mxu0 %v316
    %1159 = vmatpush.msra.mxu0 %v312
    %1160 = vmatpush.msra.mxu0 %v308
    %1161 = vmatpush.msra.mxu0 %v304
    %1162 = vmatmul.f32.gmra.mxu0 %v1121
    %v1163 = vpop.f32.mrf.mxu0
    %v1164 = vadd.f32 0.0, %v1163
    %1165 = vdwg.mxu0
    %1166 = vmatpush.msra.mxu0 %v365
    %1167 = vmatpush.msra.mxu0 %v361
    %1168 = vmatpush.msra.mxu0 %v357
    %1169 = vmatpush.msra.mxu0 %v353
    %1170 = vmatpush.msra.mxu0 %v349
    %1171 = vmatpush.msra.mxu0 %v345
    %1172 = vmatpush.msra.mxu0 %v341
    %1173 = vmatpush.msra.mxu0 %v337
    %1174 = vmatpush.msra.mxu0 %v333
    %1175 = vmatpush.msra.mxu0 %v329
    %1176 = vmatpush.msra.mxu0 %v325
    %1177 = vmatpush.msra.mxu0 %v321
    %1178 = vmatpush.msra.mxu0 %v317
    %1179 = vmatpush.msra.mxu0 %v313
    %1180 = vmatpush.msra.mxu0 %v309
    %1181 = vmatpush.msra.mxu0 %v305
    %1182 = vmatmul.f32.gmra.mxu0 %v1121
    %v1183 = vpop.f32.mrf.mxu0
    %v1184 = vadd.f32 0.0, %v1183
    %1185 = vdwg.mxu0
    %1186 = vmatpush.msra.mxu0 %v366
    %1187 = vmatpush.msra.mxu0 %v362
    %1188 = vmatpush.msra.mxu0 %v358
    %1189 = vmatpush.msra.mxu0 %v354
    %1190 = vmatpush.msra.mxu0 %v350
    %1191 = vmatpush.msra.mxu0 %v346
    %1192 = vmatpush.msra.mxu0 %v342
    %1193 = vmatpush.msra.mxu0 %v338
    %1194 = vmatpush.msra.mxu0 %v334
    %1195 = vmatpush.msra.mxu0 %v330
    %1196 = vmatpush.msra.mxu0 %v326
    %1197 = vmatpush.msra.mxu0 %v322
    %1198 = vmatpush.msra.mxu0 %v318
    %1199 = vmatpush.msra.mxu0 %v314
    %1200 = vmatpush.msra.mxu0 %v310
    %1201 = vmatpush.msra.mxu0 %v306
    %1202 = vmatmul.f32.gmra.mxu0 %v1121
    %v1203 = vpop.f32.mrf.mxu0
    %v1204 = vadd.f32 0.0, %v1203
    %1205 = vdwg.mxu0
    %v1206 = vadd.f32 %v1122, %v1144
    %v1207 = vadd.f32 %v1123, %v1164
    %v1208 = vadd.f32 %v1124, %v1184
    %v1209 = vadd.f32 %v1125, %v1204
    %v1210 = vxor.u32 %v1206, 2147483648
    %v1211 = vmul.f32 %v1210, 1.442695
    %v1212 = vpow.pop %v1211
    %v1213 = vadd.f32 %v1212, 1.0
    %v1214 = vrcp.pop %v1213
    %v1215 = vmul.f32 %v1213, %v1214
    %v1216 = vsub.f32 1.0, %v1215
    %v1217 = vmul.f32 %v1214, %v1216
    %v1218 = vadd.f32 %v1214, %v1217
    %vm1219 = vweird.f32 %v1213
    %vm1220 = vweird.f32 %v1214
    %vm1221 = vmor %vm1219, %vm1220
    %v1222 = vsel %vm1221, %v1214, %v1218
    %v1223 = vand.u32 2147483647, %v1213
    %vm1224 = vcmp.eq.f32.partialorder %v1223, 8.507059e+37
    %v1225 = vand.u32 %v1213, 2147483648
    %v1226 = vor.u32 1.1754944e-38, %v1225
    %v1227 = vsel %vm1224, %v1226, %v1222
    %v1228 = vmul.f32 1.0, %v1227
    %v1229 = vxor.u32 %v1207, 2147483648
    %v1230 = vmul.f32 %v1229, 1.442695
    %v1231 = vpow.pop %v1230
    %v1232 = vadd.f32 %v1231, 1.0
    %v1233 = vrcp.pop %v1232
    %v1234 = vmul.f32 %v1232, %v1233
    %v1235 = vsub.f32 1.0, %v1234
    %v1236 = vmul.f32 %v1233, %v1235
    %v1237 = vadd.f32 %v1233, %v1236
    %vm1238 = vweird.f32 %v1232
    %vm1239 = vweird.f32 %v1233
    %vm1240 = vmor %vm1238, %vm1239
    %v1241 = vsel %vm1240, %v1233, %v1237
    %v1242 = vand.u32 2147483647, %v1232
    %vm1243 = vcmp.eq.f32.partialorder %v1242, 8.507059e+37
    %v1244 = vand.u32 %v1232, 2147483648
    %v1245 = vor.u32 1.1754944e-38, %v1244
    %v1246 = vsel %vm1243, %v1245, %v1241
    %v1247 = vmul.f32 1.0, %v1246
    %v1248 = vtanh.pop %v1208
    %v1249 = vxor.u32 %v1209, 2147483648
    %v1250 = vmul.f32 %v1249, 1.442695
    %v1251 = vpow.pop %v1250
    %v1252 = vadd.f32 %v1251, 1.0
    %v1253 = vrcp.pop %v1252
    %v1254 = vmul.f32 %v1252, %v1253
    %v1255 = vsub.f32 1.0, %v1254
    %v1256 = vmul.f32 %v1253, %v1255
    %v1257 = vadd.f32 %v1253, %v1256
    %vm1258 = vweird.f32 %v1252
    %vm1259 = vweird.f32 %v1253
    %vm1260 = vmor %vm1258, %vm1259
    %v1261 = vsel %vm1260, %v1253, %v1257
    %v1262 = vand.u32 2147483647, %v1252
    %vm1263 = vcmp.eq.f32.partialorder %v1262, 8.507059e+37
    %v1264 = vand.u32 %v1252, 2147483648
    %v1265 = vor.u32 1.1754944e-38, %v1264
    %v1266 = vsel %vm1263, %v1265, %v1261
    %v1267 = vmul.f32 1.0, %v1266
    %v1268 = vmul.f32 %v1247, %v1119
    %v1269 = vmul.f32 %v1228, %v1248
    %v1270 = vadd.f32 %v1268, %v1269
    %v1271 = vtanh.pop %v1270
    %v1272 = vmul.f32 %v1267, %v1271
    %v1273 = vld [vmem:[#allocation2 + $0xc0] sm:$0xff]
    %v1274 = vld [vmem:[#allocation2 + $0xc8] sm:$0xff]
    %v1275 = vld [vmem:[#allocation2 + $0xd0] sm:$0xff]
    %v1276 = vld [vmem:[#allocation2 + $0xd8] sm:$0xff]
    %1277 = vmatpush.msra.mxu0 %v363
    %1278 = vmatpush.msra.mxu0 %v359
    %1279 = vmatpush.msra.mxu0 %v355
    %1280 = vmatpush.msra.mxu0 %v351
    %1281 = vmatpush.msra.mxu0 %v347
    %1282 = vmatpush.msra.mxu0 %v343
    %1283 = vmatpush.msra.mxu0 %v339
    %1284 = vmatpush.msra.mxu0 %v335
    %1285 = vmatpush.msra.mxu0 %v331
    %1286 = vmatpush.msra.mxu0 %v327
    %1287 = vmatpush.msra.mxu0 %v323
    %1288 = vmatpush.msra.mxu0 %v319
    %1289 = vmatpush.msra.mxu0 %v315
    %1290 = vmatpush.msra.mxu0 %v311
    %1291 = vmatpush.msra.mxu0 %v307
    %1292 = vmatpush.msra.mxu0 %v303
    %1293 = vmatmul.f32.gmra.mxu0 %v1272
    %v1294 = vpop.f32.mrf.mxu0
    %v1295 = vadd.f32 0.0, %v1294
    %1296 = vdwg.mxu0
    %1297 = vmatpush.msra.mxu0 %v364
    %1298 = vmatpush.msra.mxu0 %v360
    %1299 = vmatpush.msra.mxu0 %v356
    %1300 = vmatpush.msra.mxu0 %v352
    %1301 = vmatpush.msra.mxu0 %v348
    %1302 = vmatpush.msra.mxu0 %v344
    %1303 = vmatpush.msra.mxu0 %v340
    %1304 = vmatpush.msra.mxu0 %v336
    %1305 = vmatpush.msra.mxu0 %v332
    %1306 = vmatpush.msra.mxu0 %v328
    %1307 = vmatpush.msra.mxu0 %v324
    %1308 = vmatpush.msra.mxu0 %v320
    %1309 = vmatpush.msra.mxu0 %v316
    %1310 = vmatpush.msra.mxu0 %v312
    %1311 = vmatpush.msra.mxu0 %v308
    %1312 = vmatpush.msra.mxu0 %v304
    %1313 = vmatmul.f32.gmra.mxu0 %v1272
    %v1314 = vpop.f32.mrf.mxu0
    %v1315 = vadd.f32 0.0, %v1314
    %1316 = vdwg.mxu0
    %1317 = vmatpush.msra.mxu0 %v365
    %1318 = vmatpush.msra.mxu0 %v361
    %1319 = vmatpush.msra.mxu0 %v357
    %1320 = vmatpush.msra.mxu0 %v353
    %1321 = vmatpush.msra.mxu0 %v349
    %1322 = vmatpush.msra.mxu0 %v345
    %1323 = vmatpush.msra.mxu0 %v341
    %1324 = vmatpush.msra.mxu0 %v337
    %1325 = vmatpush.msra.mxu0 %v333
    %1326 = vmatpush.msra.mxu0 %v329
    %1327 = vmatpush.msra.mxu0 %v325
    %1328 = vmatpush.msra.mxu0 %v321
    %1329 = vmatpush.msra.mxu0 %v317
    %1330 = vmatpush.msra.mxu0 %v313
    %1331 = vmatpush.msra.mxu0 %v309
    %1332 = vmatpush.msra.mxu0 %v305
    %1333 = vmatmul.f32.gmra.mxu0 %v1272
    %v1334 = vpop.f32.mrf.mxu0
    %v1335 = vadd.f32 0.0, %v1334
    %1336 = vdwg.mxu0
    %1337 = vmatpush.msra.mxu0 %v366
    %1338 = vmatpush.msra.mxu0 %v362
    %1339 = vmatpush.msra.mxu0 %v358
    %1340 = vmatpush.msra.mxu0 %v354
    %1341 = vmatpush.msra.mxu0 %v350
    %1342 = vmatpush.msra.mxu0 %v346
    %1343 = vmatpush.msra.mxu0 %v342
    %1344 = vmatpush.msra.mxu0 %v338
    %1345 = vmatpush.msra.mxu0 %v334
    %1346 = vmatpush.msra.mxu0 %v330
    %1347 = vmatpush.msra.mxu0 %v326
    %1348 = vmatpush.msra.mxu0 %v322
    %1349 = vmatpush.msra.mxu0 %v318
    %1350 = vmatpush.msra.mxu0 %v314
    %1351 = vmatpush.msra.mxu0 %v310
    %1352 = vmatpush.msra.mxu0 %v306
    %1353 = vmatmul.f32.gmra.mxu0 %v1272
    %v1354 = vpop.f32.mrf.mxu0
    %v1355 = vadd.f32 0.0, %v1354
    %1356 = vdwg.mxu0
    %v1357 = vadd.f32 %v1273, %v1295
    %v1358 = vadd.f32 %v1274, %v1315
    %v1359 = vadd.f32 %v1275, %v1335
    %v1360 = vadd.f32 %v1276, %v1355
    %v1361 = vxor.u32 %v1357, 2147483648
    %v1362 = vmul.f32 %v1361, 1.442695
    %v1363 = vpow.pop %v1362
    %v1364 = vadd.f32 %v1363, 1.0
    %v1365 = vrcp.pop %v1364
    %v1366 = vmul.f32 %v1364, %v1365
    %v1367 = vsub.f32 1.0, %v1366
    %v1368 = vmul.f32 %v1365, %v1367
    %v1369 = vadd.f32 %v1365, %v1368
    %vm1370 = vweird.f32 %v1364
    %vm1371 = vweird.f32 %v1365
    %vm1372 = vmor %vm1370, %vm1371
    %v1373 = vsel %vm1372, %v1365, %v1369
    %v1374 = vand.u32 2147483647, %v1364
    %vm1375 = vcmp.eq.f32.partialorder %v1374, 8.507059e+37
    %v1376 = vand.u32 %v1364, 2147483648
    %v1377 = vor.u32 1.1754944e-38, %v1376
    %v1378 = vsel %vm1375, %v1377, %v1373
    %v1379 = vmul.f32 1.0, %v1378
    %v1380 = vxor.u32 %v1358, 2147483648
    %v1381 = vmul.f32 %v1380, 1.442695
    %v1382 = vpow.pop %v1381
    %v1383 = vadd.f32 %v1382, 1.0
    %v1384 = vrcp.pop %v1383
    %v1385 = vmul.f32 %v1383, %v1384
    %v1386 = vsub.f32 1.0, %v1385
    %v1387 = vmul.f32 %v1384, %v1386
    %v1388 = vadd.f32 %v1384, %v1387
    %vm1389 = vweird.f32 %v1383
    %vm1390 = vweird.f32 %v1384
    %vm1391 = vmor %vm1389, %vm1390
    %v1392 = vsel %vm1391, %v1384, %v1388
    %v1393 = vand.u32 2147483647, %v1383
    %vm1394 = vcmp.eq.f32.partialorder %v1393, 8.507059e+37
    %v1395 = vand.u32 %v1383, 2147483648
    %v1396 = vor.u32 1.1754944e-38, %v1395
    %v1397 = vsel %vm1394, %v1396, %v1392
    %v1398 = vmul.f32 1.0, %v1397
    %v1399 = vtanh.pop %v1359
    %v1400 = vxor.u32 %v1360, 2147483648
    %v1401 = vmul.f32 %v1400, 1.442695
    %v1402 = vpow.pop %v1401
    %v1403 = vadd.f32 %v1402, 1.0
    %v1404 = vrcp.pop %v1403
    %v1405 = vmul.f32 %v1403, %v1404
    %v1406 = vsub.f32 1.0, %v1405
    %v1407 = vmul.f32 %v1404, %v1406
    %v1408 = vadd.f32 %v1404, %v1407
    %vm1409 = vweird.f32 %v1403
    %vm1410 = vweird.f32 %v1404
    %vm1411 = vmor %vm1409, %vm1410
    %v1412 = vsel %vm1411, %v1404, %v1408
    %v1413 = vand.u32 2147483647, %v1403
    %vm1414 = vcmp.eq.f32.partialorder %v1413, 8.507059e+37
    %v1415 = vand.u32 %v1403, 2147483648
    %v1416 = vor.u32 1.1754944e-38, %v1415
    %v1417 = vsel %vm1414, %v1416, %v1412
    %v1418 = vmul.f32 1.0, %v1417
    %v1419 = vmul.f32 %v1398, %v1270
    %v1420 = vmul.f32 %v1379, %v1399
    %v1421 = vadd.f32 %v1419, %v1420
    %v1422 = vtanh.pop %v1421
    %v1423 = vmul.f32 %v1418, %v1422
    %v1424 = vld [vmem:[#allocation2 + $0xe0] sm:$0xff]
    %v1425 = vld [vmem:[#allocation2 + $0xe8] sm:$0xff]
    %v1426 = vld [vmem:[#allocation2 + $0xf0] sm:$0xff]
    %v1427 = vld [vmem:[#allocation2 + $0xf8] sm:$0xff]
    %1428 = vmatpush.msra.mxu0 %v363
    %1429 = vmatpush.msra.mxu0 %v359
    %1430 = vmatpush.msra.mxu0 %v355
    %1431 = vmatpush.msra.mxu0 %v351
    %1432 = vmatpush.msra.mxu0 %v347
    %1433 = vmatpush.msra.mxu0 %v343
    %1434 = vmatpush.msra.mxu0 %v339
    %1435 = vmatpush.msra.mxu0 %v335
    %1436 = vmatpush.msra.mxu0 %v331
    %1437 = vmatpush.msra.mxu0 %v327
    %1438 = vmatpush.msra.mxu0 %v323
    %1439 = vmatpush.msra.mxu0 %v319
    %1440 = vmatpush.msra.mxu0 %v315
    %1441 = vmatpush.msra.mxu0 %v311
    %1442 = vmatpush.msra.mxu0 %v307
    %1443 = vmatpush.msra.mxu0 %v303
    %1444 = vmatmul.f32.gmra.mxu0 %v1423
    %v1445 = vpop.f32.mrf.mxu0
    %v1446 = vadd.f32 0.0, %v1445
    %1447 = vdwg.mxu0
    %1448 = vmatpush.msra.mxu0 %v364
    %1449 = vmatpush.msra.mxu0 %v360
    %1450 = vmatpush.msra.mxu0 %v356
    %1451 = vmatpush.msra.mxu0 %v352
    %1452 = vmatpush.msra.mxu0 %v348
    %1453 = vmatpush.msra.mxu0 %v344
    %1454 = vmatpush.msra.mxu0 %v340
    %1455 = vmatpush.msra.mxu0 %v336
    %1456 = vmatpush.msra.mxu0 %v332
    %1457 = vmatpush.msra.mxu0 %v328
    %1458 = vmatpush.msra.mxu0 %v324
    %1459 = vmatpush.msra.mxu0 %v320
    %1460 = vmatpush.msra.mxu0 %v316
    %1461 = vmatpush.msra.mxu0 %v312
    %1462 = vmatpush.msra.mxu0 %v308
    %1463 = vmatpush.msra.mxu0 %v304
    %1464 = vmatmul.f32.gmra.mxu0 %v1423
    %v1465 = vpop.f32.mrf.mxu0
    %v1466 = vadd.f32 0.0, %v1465
    %1467 = vdwg.mxu0
    %1468 = vmatpush.msra.mxu0 %v365
    %1469 = vmatpush.msra.mxu0 %v361
    %1470 = vmatpush.msra.mxu0 %v357
    %1471 = vmatpush.msra.mxu0 %v353
    %1472 = vmatpush.msra.mxu0 %v349
    %1473 = vmatpush.msra.mxu0 %v345
    %1474 = vmatpush.msra.mxu0 %v341
    %1475 = vmatpush.msra.mxu0 %v337
    %1476 = vmatpush.msra.mxu0 %v333
    %1477 = vmatpush.msra.mxu0 %v329
    %1478 = vmatpush.msra.mxu0 %v325
    %1479 = vmatpush.msra.mxu0 %v321
    %1480 = vmatpush.msra.mxu0 %v317
    %1481 = vmatpush.msra.mxu0 %v313
    %1482 = vmatpush.msra.mxu0 %v309
    %1483 = vmatpush.msra.mxu0 %v305
    %1484 = vmatmul.f32.gmra.mxu0 %v1423
    %v1485 = vpop.f32.mrf.mxu0
    %v1486 = vadd.f32 0.0, %v1485
    %1487 = vdwg.mxu0
    %1488 = vmatpush.msra.mxu0 %v366
    %1489 = vmatpush.msra.mxu0 %v362
    %1490 = vmatpush.msra.mxu0 %v358
    %1491 = vmatpush.msra.mxu0 %v354
    %1492 = vmatpush.msra.mxu0 %v350
    %1493 = vmatpush.msra.mxu0 %v346
    %1494 = vmatpush.msra.mxu0 %v342
    %1495 = vmatpush.msra.mxu0 %v338
    %1496 = vmatpush.msra.mxu0 %v334
    %1497 = vmatpush.msra.mxu0 %v330
    %1498 = vmatpush.msra.mxu0 %v326
    %1499 = vmatpush.msra.mxu0 %v322
    %1500 = vmatpush.msra.mxu0 %v318
    %1501 = vmatpush.msra.mxu0 %v314
    %1502 = vmatpush.msra.mxu0 %v310
    %1503 = vmatpush.msra.mxu0 %v306
    %1504 = vmatmul.f32.gmra.mxu0 %v1423
    %v1505 = vpop.f32.mrf.mxu0
    %v1506 = vadd.f32 0.0, %v1505
    %1507 = vdwg.mxu0
    %v1508 = vadd.f32 %v1424, %v1446
    %v1509 = vadd.f32 %v1425, %v1466
    %v1510 = vadd.f32 %v1426, %v1486
    %v1511 = vadd.f32 %v1427, %v1506
    %v1512 = vxor.u32 %v1508, 2147483648
    %v1513 = vmul.f32 %v1512, 1.442695
    %v1514 = vpow.pop %v1513
    %v1515 = vadd.f32 %v1514, 1.0
    %v1516 = vrcp.pop %v1515
    %v1517 = vmul.f32 %v1515, %v1516
    %v1518 = vsub.f32 1.0, %v1517
    %v1519 = vmul.f32 %v1516, %v1518
    %v1520 = vadd.f32 %v1516, %v1519
    %vm1521 = vweird.f32 %v1515
    %vm1522 = vweird.f32 %v1516
    %vm1523 = vmor %vm1521, %vm1522
    %v1524 = vsel %vm1523, %v1516, %v1520
    %v1525 = vand.u32 2147483647, %v1515
    %vm1526 = vcmp.eq.f32.partialorder %v1525, 8.507059e+37
    %v1527 = vand.u32 %v1515, 2147483648
    %v1528 = vor.u32 1.1754944e-38, %v1527
    %v1529 = vsel %vm1526, %v1528, %v1524
    %v1530 = vmul.f32 1.0, %v1529
    %v1531 = vxor.u32 %v1509, 2147483648
    %v1532 = vmul.f32 %v1531, 1.442695
    %v1533 = vpow.pop %v1532
    %v1534 = vadd.f32 %v1533, 1.0
    %v1535 = vrcp.pop %v1534
    %v1536 = vmul.f32 %v1534, %v1535
    %v1537 = vsub.f32 1.0, %v1536
    %v1538 = vmul.f32 %v1535, %v1537
    %v1539 = vadd.f32 %v1535, %v1538
    %vm1540 = vweird.f32 %v1534
    %vm1541 = vweird.f32 %v1535
    %vm1542 = vmor %vm1540, %vm1541
    %v1543 = vsel %vm1542, %v1535, %v1539
    %v1544 = vand.u32 2147483647, %v1534
    %vm1545 = vcmp.eq.f32.partialorder %v1544, 8.507059e+37
    %v1546 = vand.u32 %v1534, 2147483648
    %v1547 = vor.u32 1.1754944e-38, %v1546
    %v1548 = vsel %vm1545, %v1547, %v1543
    %v1549 = vmul.f32 1.0, %v1548
    %v1550 = vtanh.pop %v1510
    %v1551 = vxor.u32 %v1511, 2147483648
    %v1552 = vmul.f32 %v1551, 1.442695
    %v1553 = vpow.pop %v1552
    %v1554 = vadd.f32 %v1553, 1.0
    %v1555 = vrcp.pop %v1554
    %v1556 = vmul.f32 %v1554, %v1555
    %v1557 = vsub.f32 1.0, %v1556
    %v1558 = vmul.f32 %v1555, %v1557
    %v1559 = vadd.f32 %v1555, %v1558
    %vm1560 = vweird.f32 %v1554
    %vm1561 = vweird.f32 %v1555
    %vm1562 = vmor %vm1560, %vm1561
    %v1563 = vsel %vm1562, %v1555, %v1559
    %v1564 = vand.u32 2147483647, %v1554
    %vm1565 = vcmp.eq.f32.partialorder %v1564, 8.507059e+37
    %v1566 = vand.u32 %v1554, 2147483648
    %v1567 = vor.u32 1.1754944e-38, %v1566
    %v1568 = vsel %vm1565, %v1567, %v1563
    %v1569 = vmul.f32 1.0, %v1568
    %v1570 = vmul.f32 %v1549, %v1421
    %v1571 = vmul.f32 %v1530, %v1550
    %v1572 = vadd.f32 %v1570, %v1571
    %v1573 = vtanh.pop %v1572
    %v1574 = vmul.f32 %v1569, %v1573
    %v1575 = vmax.f32 %v1574, 0.0
    %v1576 = vld [vmem:[#allocation6] sm:$0xff]
    %v1577 = vld [vmem:[#allocation6 + $0x8] sm:$0xff]
    %v1578 = vld [vmem:[#allocation6 + $0x10] sm:$0xff]
    %v1579 = vld [vmem:[#allocation6 + $0x18] sm:$0xff]
    %v1580 = vld [vmem:[#allocation6 + $0x20] sm:$0xff]
    %v1581 = vld [vmem:[#allocation6 + $0x28] sm:$0xff]
    %v1582 = vld [vmem:[#allocation6 + $0x30] sm:$0xff]
    %v1583 = vld [vmem:[#allocation6 + $0x38] sm:$0xff]
    %v1584 = vld [vmem:[#allocation6 + $0x40] sm:$0xff]
    %v1585 = vld [vmem:[#allocation6 + $0x48] sm:$0xff]
    %v1586 = vld [vmem:[#allocation6 + $0x50] sm:$0xff]
    %v1587 = vld [vmem:[#allocation6 + $0x58] sm:$0xff]
    %v1588 = vld [vmem:[#allocation6 + $0x60] sm:$0xff]
    %v1589 = vld [vmem:[#allocation6 + $0x68] sm:$0xff]
    %v1590 = vld [vmem:[#allocation6 + $0x70] sm:$0xff]
    %v1591 = vld [vmem:[#allocation6 + $0x78] sm:$0xff]
    %v1592 = vld [vmem:[%s5] sm:$0x1]
    %v1594 = vperm.slane %v1592, 0
    %1596 = vmatpush.msra.mxu0 %v1591
    %1597 = vmatpush.msra.mxu0 %v1590
    %1598 = vmatpush.msra.mxu0 %v1589
    %1599 = vmatpush.msra.mxu0 %v1588
    %1600 = vmatpush.msra.mxu0 %v1587
    %1601 = vmatpush.msra.mxu0 %v1586
    %1602 = vmatpush.msra.mxu0 %v1585
    %1603 = vmatpush.msra.mxu0 %v1584
    %1604 = vmatpush.msra.mxu0 %v1583
    %1605 = vmatpush.msra.mxu0 %v1582
    %1606 = vmatpush.msra.mxu0 %v1581
    %1607 = vmatpush.msra.mxu0 %v1580
    %1608 = vmatpush.msra.mxu0 %v1579
    %1609 = vmatpush.msra.mxu0 %v1578
    %1610 = vmatpush.msra.mxu0 %v1577
    %1611 = vmatpush.msra.mxu0 %v1576
    %1612 = vmatmul.f32.gmra.mxu0 %v1575
    %v1613 = vpop.f32.mrf.mxu0
    %v1614 = vadd.f32 %v1594, %v1613
    %1615 = vdwg.mxu0
    %1616 = vst [vmem:[#allocation8] sm:$0xff] %v1614
    // Predicated region
    $region34: #{tpu_custom_call.1} parent=1 // pred_check
      _
    $region35: #{tpu_custom_call.1} parent=1 // pred_check_branch
      %1618 = sbr.rel (0) target = $region37
    $region36: #{tpu_custom_call.1} parent=1 // pred_region
      %1620 = vsyncadd [#allocation5], 0
      %s1622 = sshll.u32 [#allocation8], 4
      %s1623 = int_to_ptr.vmem [resolvable:$true] %s1622
      %s1624 = sshll.u32 %s6, 4
      %s1625 = int_to_ptr.hbm [resolvable:$true] %s1624
      %1627 = dma.vmem_to_hbm [thread:$0]  %s1623, 128, %s1625, [#allocation5]
    $region37: #{tpu_custom_call.1} parent=1 // pred_fallthru
      _
    // Predicated region
    $region38: #{tpu_custom_call.1} parent=1 // pred_check
      _
    $region39: #{tpu_custom_call.1} parent=1 // pred_check_branch
      %1629 = sbr.rel (0) target = $region41
    $region40: #{tpu_custom_call.1} parent=1 // pred_region
      %1631 = dma.done [#allocation5], 128
    $region41: #{tpu_custom_call.1} parent=1 // pred_fallthru
      _
    %1632 = vsyncpa [#allocation4], 1
    %1633 = vsyncpa [#allocation7], 1
    %1634 = vsyncpa [#allocation5], 1

</llo_original>
